<compile_context>
chip_gen: v7x
topology: tpu7x:2x2x1
jax: 0.10.0
libtpu: 0.0.40
codegen_flags: <defaults>
</compile_context>

<pallas_src>
import functools
import math

import numpy as np
import jax
import jax.numpy as jnp
from jax.experimental import pallas as pl
from jax.experimental.pallas import tpu as pltpu

LANE = 128       # lane width (last dim)
MIB = 1 << 20


def _round_up(x, m):
    return (x + m - 1) // m * m


def _pad2(x, rows, cols):
    r, c = x.shape
    return jnp.pad(x, ((0, rows - r), (0, cols - c)))


def _vmem_limit(tile_bytes):
    # Size the scoped-VMEM limit from the actual tile footprint with headroom,
    # capped at 64 MiB (v7x physical per-TensorCore VMEM).
    return int(min(max(2 * tile_bytes + 4 * MIB, 16 * MIB), 64 * MIB))


# ------------------------- fused small-graph kernel -------------------------
def _fused_mpnn_kernel(a_ref, h_ref, w1_ref, s1_ref, w2_ref, s2_ref,
                       w3_ref, s3_ref, out_ref):
    """All three GCN layers for a graph that fits entirely in VMEM."""
    a = a_ref[...]

    def layer(h, w_ref, s_ref, relu):
        # H @ W' first, then A @ (H @ W')  (do NOT flip the ordering).
        hw = jnp.dot(h, w_ref[...], preferred_element_type=jnp.float32)
        z = jnp.dot(a, hw.astype(a.dtype), preferred_element_type=jnp.float32)
        z = z + s_ref[...]
        if relu:
            z = jnp.maximum(z, 0.0)
        return z

    z = layer(h_ref[...], w1_ref, s1_ref, True).astype(a.dtype)
    z = layer(z, w2_ref, s2_ref, True).astype(a.dtype)
    z = layer(z, w3_ref, s3_ref, False)
    out_ref[...] = z.astype(out_ref.dtype)


def _fused_call(a, h, layers, *, out_dtype):
    assert len(layers) == 3
    n_pad = a.shape[0]
    f_out_last = layers[-1][0].shape[1]

    operands = [a, h]
    in_specs = [pl.BlockSpec(a.shape, lambda i: (0, 0)),
                pl.BlockSpec(h.shape, lambda i: (0, 0))]
    tile_bytes = a.size * a.dtype.itemsize + h.size * h.dtype.itemsize
    flops = 0
    f_prev = h.shape[1]
    for w, s in layers:
        operands += [w, s]
        in_specs += [pl.BlockSpec(w.shape, lambda i: (0, 0)),
                     pl.BlockSpec(s.shape, lambda i: (0, 0))]
        tile_bytes += w.size * w.dtype.itemsize + s.size * s.dtype.itemsize
        flops += 2 * n_pad * f_prev * w.shape[1] + 2 * n_pad * n_pad * w.shape[1]
        f_prev = w.shape[1]
    out_bytes = n_pad * f_out_last * jnp.dtype(out_dtype).itemsize
    tile_bytes += out_bytes

    return pl.pallas_call(
        _fused_mpnn_kernel,
        out_shape=jax.ShapeDtypeStruct((n_pad, f_out_last), out_dtype),
        grid=(1,),
        in_specs=in_specs,
        out_specs=pl.BlockSpec((n_pad, f_out_last), lambda i: (0, 0)),
        compiler_params=pltpu.CompilerParams(
            dimension_semantics=("arbitrary",),
            vmem_limit_bytes=_vmem_limit(tile_bytes)),
        cost_estimate=pl.CostEstimate(flops=int(flops), transcendentals=0,
                                      bytes_accessed=int(tile_bytes + out_bytes)),
    )(*operands)


# --------------------- general tiled path: projection -----------------------
def _project_kernel(h_ref, w_ref, hw_ref):
    hw_ref[...] = jnp.dot(h_ref[...], w_ref[...],
                          preferred_element_type=jnp.float32).astype(hw_ref.dtype)


def _project_call(h, w, *, tr, out_dtype):
    """HW = H @ W' (computed ONCE per layer, row-tiled over N)."""
    n_pad, f_in = h.shape
    f_out = w.shape[1]
    grid = (n_pad // tr,)
    flops = 2 * n_pad * f_in * f_out
    bytes_accessed = (h.size * h.dtype.itemsize + w.size * w.dtype.itemsize
                      + n_pad * f_out * jnp.dtype(out_dtype).itemsize)
    tile_bytes = (2 * tr * f_in * h.dtype.itemsize            # H tile, double buffered
                  + 2 * w.size * w.dtype.itemsize             # W resident (x2 default)
                  + 2 * tr * f_out * jnp.dtype(out_dtype).itemsize)
    return pl.pallas_call(
        _project_kernel,
        out_shape=jax.ShapeDtypeStruct((n_pad, f_out), out_dtype),
        grid=grid,
        in_specs=[pl.BlockSpec((tr, f_in), lambda i: (i, 0)),
                  pl.BlockSpec((f_in, f_out), lambda i: (0, 0))],
        out_specs=pl.BlockSpec((tr, f_out), lambda i: (i, 0)),
        compiler_params=pltpu.CompilerParams(
            dimension_semantics=("parallel",),
            vmem_limit_bytes=_vmem_limit(tile_bytes)),
        cost_estimate=pl.CostEstimate(flops=int(flops), transcendentals=0,
                                      bytes_accessed=int(bytes_accessed)),
    )(h, w)


# -------------------- general tiled path: A aggregation ---------------------
def _aggregate_kernel(a_ref, hw_ref, shift_ref, out_ref, acc_ref, *, apply_relu):
    """Z[rows] = (relu)(A[rows,:] @ HW + shift), K-tiled with f32 accumulator."""
    k = pl.program_id(1)

    @pl.when(k == 0)
    def _():
        acc_ref[...] = jnp.zeros_like(acc_ref)

    acc_ref[...] += jnp.dot(a_ref[...], hw_ref[...],
                            preferred_element_type=jnp.float32)

    @pl.when(k == pl.num_programs(1) - 1)
    def _():
        z = acc_ref[...] + shift_ref[...]
        if apply_relu:
            z = jnp.maximum(z, 0.0)
        out_ref[...] = z.astype(out_ref.dtype)


def _aggregate_call(a, hw, shift, *, tm, tk, apply_relu, out_dtype):
    n_pad = a.shape[0]
    f_out = hw.shape[1]
    grid = (n_pad // tm, n_pad // tk)       # (rows: parallel, K: arbitrary, last)
    flops = 2 * n_pad * n_pad * f_out
    bytes_accessed = (a.size * a.dtype.itemsize
                      + hw.size * hw.dtype.itemsize * grid[0]   # HW re-streamed per row block
                      + shift.size * shift.dtype.itemsize
                      + n_pad * f_out * jnp.dtype(out_dtype).itemsize)
    tile_bytes = (2 * tm * tk * a.dtype.itemsize                # A tile x2
                  + 2 * tk * f_out * hw.dtype.itemsize          # HW tile x2
                  + tm * f_out * 4                              # f32 accumulator
                  + 2 * tm * f_out * jnp.dtype(out_dtype).itemsize
                  + 2 * f_out * 4)                              # shift
    return pl.pallas_call(
        functools.partial(_aggregate_kernel, apply_relu=apply_relu),
        out_shape=jax.ShapeDtypeStruct((n_pad, f_out), out_dtype),
        grid=grid,
        in_specs=[
            pl.BlockSpec((tm, tk), lambda i, k: (i, k)),        # A tile
            pl.BlockSpec((tk, f_out), lambda i, k: (k, 0)),     # HW tile
            pl.BlockSpec((1, f_out), lambda i, k: (0, 0)),      # folded shift
        ],
        out_specs=pl.BlockSpec((tm, f_out), lambda i, k: (i, 0)),
        scratch_shapes=[pltpu.VMEM((tm, f_out), jnp.float32)],
        compiler_params=pltpu.CompilerParams(
            dimension_semantics=("parallel", "arbitrary"),
            vmem_limit_bytes=_vmem_limit(tile_bytes)),
        cost_estimate=pl.CostEstimate(flops=int(flops), transcendentals=0,
                                      bytes_accessed=int(bytes_accessed)),
    )(a, hw, shift)


# ----------------------------- Forward wrapper -------------------------------
def mpnn_forward(a_norm, x, folded_params, *, compute_dtype=jnp.bfloat16,
                 tm=256, tk=512, force_tiled=False):
    """folded_params: list of (W_folded [Fin,Fout] f32, shift [1,Fout] f32)."""
    n = x.shape[0]
    out_dim = folded_params[-1][0].shape[1]
    dims = [x.shape[1]] + [w.shape[1] for w, _ in folded_params]
    dims_pad = [_round_up(d, LANE) for d in dims]

    # Lane-dense A rows even for tiny graphs (unmasked stores/loads).
    n_pad = _round_up(n, LANE)

    use_fused = (not force_tiled) and len(folded_params) == 3 and n_pad <= 1024
    if use_fused:
        a_p = _pad2(a_norm, n_pad, n_pad).astype(compute_dtype)
        h = _pad2(x, n_pad, dims_pad[0]).astype(compute_dtype)
        layers = []
        for li, (w, s) in enumerate(folded_params):
            layers.append((_pad2(w, dims_pad[li], dims_pad[li + 1]).astype(compute_dtype),
                           _pad2(s, 1, dims_pad[li + 1]).astype(jnp.float32)))
        out = _fused_call(a_p, h, layers, out_dtype=jnp.float32)
        return out[:n, :out_dim]

    # General tiled path (large graphs): per layer, hoisted projection + K-tiled
    # aggregation.  VMEM footprint is constant in N.
    tm = min(tm, n_pad)
    tk = min(tk, n_pad)
    n_pad = _round_up(n_pad, math.lcm(tm, tk))

    a_p = _pad2(a_norm, n_pad, n_pad).astype(compute_dtype)
    h = _pad2(x, n_pad, dims_pad[0]).astype(compute_dtype)
    n_layers = len(folded_params)
    for li, (w, s) in enumerate(folded_params):
        f_ip, f_op = dims_pad[li], dims_pad[li + 1]
        w_p = _pad2(w, f_ip, f_op).astype(compute_dtype)
        s_p = _pad2(s, 1, f_op).astype(jnp.float32)
        last = li == n_layers - 1
        hw = _project_call(h, w_p, tr=tm, out_dtype=compute_dtype)
        # NOTE: padded columns of A are zero, so relu(shift) garbage in padded
        # rows of the previous activation never reaches real rows.
        h = _aggregate_call(a_p, hw, s_p, tm=tm, tk=tk,
                            apply_relu=not last,
                            out_dtype=jnp.float32 if last else compute_dtype)
    return h[:n, :out_dim]


# ----------------------------- Glue / setup ----------------------------------
def build_normalized_adjacency(edge_index, num_nodes):
    """Dense D^{-1/2} (A + I) D^{-1/2} like PyG gcn_norm (add self loops)."""
    src, dst = np.asarray(edge_index)
    a = np.zeros((num_nodes, num_nodes), dtype=np.float32)
    a[dst, src] = 1.0                     # message flows source -> target
    np.fill_diagonal(a, 1.0)              # self loops
    deg = a.sum(axis=1)
    dinv = np.where(deg > 0, deg ** -0.5, 0.0).astype(np.float32)
    return jnp.asarray(dinv[:, None] * a * dinv[None, :])


def fold_gcn_bn(w, b, gamma, beta, rmean, rvar, eps=1e-5):
    """Exact algebraic fold: A@(X@W)+b then BN  ==  A@(X@W') + shift'."""
    scale = gamma / jnp.sqrt(rvar + eps)                  # [Fout]
    w_f = (w * scale[None, :]).astype(jnp.float32)        # column-scaled weights
    shift = (b * scale + (beta - rmean * scale))[None, :].astype(jnp.float32)
    return w_f, shift


def init_raw_params(key, input_dim, hidden_dim, output_dim):
    dims = [(input_dim, hidden_dim), (hidden_dim, hidden_dim), (hidden_dim, output_dim)]
    keys = jax.random.split(key, 4 * len(dims))
    raw, ki = [], 0
    for fin, fout in dims:
        limit = np.sqrt(6.0 / (fin + fout))               # glorot-uniform (PyG default)
        w = jax.random.uniform(keys[ki], (fin, fout), jnp.float32, -limit, limit); ki += 1
        b = 0.01 * jax.random.normal(keys[ki], (fout,), jnp.float32); ki += 1
        gamma = 1.0 + 0.1 * jax.random.normal(keys[ki], (fout,), jnp.float32); ki += 1
        beta = 0.1 * jax.random.normal(keys[ki], (fout,), jnp.float32); ki += 1
        rmean = jnp.zeros((fout,), jnp.float32)           # BatchNorm1d running stats
        rvar = jnp.ones((fout,), jnp.float32)
        raw.append((w, b, gamma, beta, rmean, rvar))
    return raw


def mpnn_reference(a_norm, x, raw_params, eps=1e-5):
    """Pure f32 JAX reference of the eval-mode PyTorch forward."""
    h = x
    n_layers = len(raw_params)
    for li, (w, b, gamma, beta, rmean, rvar) in enumerate(raw_params):
        z = a_norm @ (h @ w) + b[None, :]
        scale = gamma / jnp.sqrt(rvar + eps)
        z = (z - rmean[None, :]) * scale[None, :] + beta[None, :]
        if li < n_layers - 1:
            z = jnp.maximum(z, 0.0)
        h = z
    return h


# ------------------------------- main ----------------------------------------
if __name__ == "__main__":
    input_dim, hidden_dim, output_dim = 8, 32, 32   # output_dim == hidden_dim (bn3 constraint)

    key = jax.random.PRNGKey(0)
    k_x1, k_x2, k_p = jax.random.split(key, 3)

    raw_params = init_raw_params(k_p, input_dim, hidden_dim, output_dim)
    folded_params = [fold_gcn_bn(*p) for p in raw_params]

    # --- small graph (the shipped problem size): fused single-call path ------
    n1 = 16
    x1 = jax.random.normal(k_x1, (n1, input_dim), jnp.float32)
    src = list(range(n1)) + [0, 3, 5, 9, 2]
    dst = [(i + 1) % n1 for i in range(n1)] + [8, 12, 10, 14, 7]
    edge_index1 = np.array([src + dst, dst + src], dtype=np.int32)  # both directions
    a1 = build_normalized_adjacency(edge_index1, n1)
    ref1 = mpnn_reference(a1, x1, raw_params)

    out1_f32 = jax.block_until_ready(
        mpnn_forward(a1, x1, folded_params, compute_dtype=jnp.float32))
    np.testing.assert_allclose(np.asarray(out1_f32), np.asarray(ref1),
                               rtol=1e-5, atol=1e-5)

    out1_bf16 = jax.block_until_ready(
        mpnn_forward(a1, x1, folded_params, compute_dtype=jnp.bfloat16))
    np.testing.assert_allclose(np.asarray(out1_bf16), np.asarray(ref1),
                               rtol=3e-2, atol=3e-2)

    # --- larger graph: exercise the hoisted-projection + K-tiled path --------
    n2 = 300
    x2 = jax.random.normal(k_x2, (n2, input_dim), jnp.float32)
    src2 = list(range(n2)) + [i for i in range(0, n2, 7)]
    dst2 = [(i + 1) % n2 for i in range(n2)] + [(i * 13 + 5) % n2 for i in range(0, n2, 7)]
    edge_index2 = np.array([src2 + dst2, dst2 + src2], dtype=np.int32)
    a2 = build_normalized_adjacency(edge_index2, n2)
    ref2 = mpnn_reference(a2, x2, raw_params)

    out2_f32 = jax.block_until_ready(
        mpnn_forward(a2, x2, folded_params, compute_dtype=jnp.float32,
                     tm=128, tk=128, force_tiled=True))
    np.testing.assert_allclose(np.asarray(out2_f32), np.asarray(ref2),
                               rtol=1e-4, atol=1e-4)

    out2_bf16 = jax.block_until_ready(
        mpnn_forward(a2, x2, folded_params, compute_dtype=jnp.bfloat16,
                     tm=128, tk=128, force_tiled=True))
    np.testing.assert_allclose(np.asarray(out2_bf16), np.asarray(ref2),
                               rtol=5e-2, atol=5e-2)

    print("KERNEL_OK")
</pallas_src>

<mosaic_0001>
module attributes {stable_mosaic.version = 11 : i64} {
  func.func @_fused_mpnn_kernel(%arg0: i32, %arg1: memref<128x128xf32, #tpu.memory_space<vmem>>, %arg2: memref<128x128xf32, #tpu.memory_space<vmem>>, %arg3: memref<128x128xf32, #tpu.memory_space<vmem>>, %arg4: memref<1x128xf32, #tpu.memory_space<vmem>>, %arg5: memref<128x128xf32, #tpu.memory_space<vmem>>, %arg6: memref<1x128xf32, #tpu.memory_space<vmem>>, %arg7: memref<128x128xf32, #tpu.memory_space<vmem>>, %arg8: memref<1x128xf32, #tpu.memory_space<vmem>>, %arg9: memref<128x128xf32, #tpu.memory_space<vmem>>) attributes {dimension_semantics = [#tpu.dimension_semantics<arbitrary>], iteration_bounds = array<i64: 1>, scalar_prefetch = 0 : i64, scratch_operands = 0 : i64, tpu.core_type = #tpu.core_type<tc>, window_params = [{pipeline_mode = #tpu.pipeline_mode<synchronous>, transform_indices = @transform_0, window_bounds = array<i64: 128, 128>}, {pipeline_mode = #tpu.pipeline_mode<synchronous>, transform_indices = @transform_1, window_bounds = array<i64: 128, 128>}, {pipeline_mode = #tpu.pipeline_mode<synchronous>, transform_indices = @transform_2, window_bounds = array<i64: 128, 128>}, {pipeline_mode = #tpu.pipeline_mode<synchronous>, transform_indices = @transform_3, window_bounds = array<i64: 1, 128>}, {pipeline_mode = #tpu.pipeline_mode<synchronous>, transform_indices = @transform_4, window_bounds = array<i64: 128, 128>}, {pipeline_mode = #tpu.pipeline_mode<synchronous>, transform_indices = @transform_5, window_bounds = array<i64: 1, 128>}, {pipeline_mode = #tpu.pipeline_mode<synchronous>, transform_indices = @transform_6, window_bounds = array<i64: 128, 128>}, {pipeline_mode = #tpu.pipeline_mode<synchronous>, transform_indices = @transform_7, window_bounds = array<i64: 1, 128>}, {pipeline_mode = #tpu.pipeline_mode<synchronous>, transform_indices = @transform_8, window_bounds = array<i64: 128, 128>}]} {
    %c0 = arith.constant 0 : index
    %c0_0 = arith.constant 0 : index
    %0 = vector.load %arg1[%c0, %c0_0] : memref<128x128xf32, #tpu.memory_space<vmem>>, vector<128x128xf32>
    %c0_1 = arith.constant 0 : index
    %c0_2 = arith.constant 0 : index
    %1 = vector.load %arg2[%c0_1, %c0_2] : memref<128x128xf32, #tpu.memory_space<vmem>>, vector<128x128xf32>
    %c0_3 = arith.constant 0 : index
    %c0_4 = arith.constant 0 : index
    %2 = vector.load %arg3[%c0_3, %c0_4] : memref<128x128xf32, #tpu.memory_space<vmem>>, vector<128x128xf32>
    %cst = arith.constant dense<0.000000e+00> : vector<128x128xf32>
    %3 = tpu.matmul %1, %2, %cst {dimension_numbers = #tpu.dot_dimension_numbers<[1], [0], [0], [1], [0, 0, 1, 1], [], []>} : vector<128x128xf32>, vector<128x128xf32>, vector<128x128xf32> -> vector<128x128xf32>
    %cst_5 = arith.constant dense<0.000000e+00> : vector<128x128xf32>
    %4 = tpu.matmul %0, %3, %cst_5 {dimension_numbers = #tpu.dot_dimension_numbers<[1], [0], [0], [1], [0, 0, 1, 1], [], []>} : vector<128x128xf32>, vector<128x128xf32>, vector<128x128xf32> -> vector<128x128xf32>
    %c0_6 = arith.constant 0 : index
    %c0_7 = arith.constant 0 : index
    %5 = vector.load %arg4[%c0_6, %c0_7] : memref<1x128xf32, #tpu.memory_space<vmem>>, vector<1x128xf32>
    %6 = vector.broadcast %5 : vector<1x128xf32> to vector<128x128xf32>
    %7 = arith.addf %4, %6 : vector<128x128xf32>
    %cst_8 = arith.constant 0.000000e+00 : f32
    %8 = vector.broadcast %cst_8 : f32 to vector<128x128xf32>
    %9 = arith.maximumf %7, %8 : vector<128x128xf32>
    %c0_9 = arith.constant 0 : index
    %c0_10 = arith.constant 0 : index
    %10 = vector.load %arg5[%c0_9, %c0_10] : memref<128x128xf32, #tpu.memory_space<vmem>>, vector<128x128xf32>
    %cst_11 = arith.constant dense<0.000000e+00> : vector<128x128xf32>
    %11 = tpu.matmul %9, %10, %cst_11 {dimension_numbers = #tpu.dot_dimension_numbers<[1], [0], [0], [1], [0, 0, 1, 1], [], []>} : vector<128x128xf32>, vector<128x128xf32>, vector<128x128xf32> -> vector<128x128xf32>
    %cst_12 = arith.constant dense<0.000000e+00> : vector<128x128xf32>
    %12 = tpu.matmul %0, %11, %cst_12 {dimension_numbers = #tpu.dot_dimension_numbers<[1], [0], [0], [1], [0, 0, 1, 1], [], []>} : vector<128x128xf32>, vector<128x128xf32>, vector<128x128xf32> -> vector<128x128xf32>
    %c0_13 = arith.constant 0 : index
    %c0_14 = arith.constant 0 : index
    %13 = vector.load %arg6[%c0_13, %c0_14] : memref<1x128xf32, #tpu.memory_space<vmem>>, vector<1x128xf32>
    %14 = vector.broadcast %13 : vector<1x128xf32> to vector<128x128xf32>
    %15 = arith.addf %12, %14 : vector<128x128xf32>
    %cst_15 = arith.constant 0.000000e+00 : f32
    %16 = vector.broadcast %cst_15 : f32 to vector<128x128xf32>
    %17 = arith.maximumf %15, %16 : vector<128x128xf32>
    %c0_16 = arith.constant 0 : index
    %c0_17 = arith.constant 0 : index
    %18 = vector.load %arg7[%c0_16, %c0_17] : memref<128x128xf32, #tpu.memory_space<vmem>>, vector<128x128xf32>
    %cst_18 = arith.constant dense<0.000000e+00> : vector<128x128xf32>
    %19 = tpu.matmul %17, %18, %cst_18 {dimension_numbers = #tpu.dot_dimension_numbers<[1], [0], [0], [1], [0, 0, 1, 1], [], []>} : vector<128x128xf32>, vector<128x128xf32>, vector<128x128xf32> -> vector<128x128xf32>
    %cst_19 = arith.constant dense<0.000000e+00> : vector<128x128xf32>
    %20 = tpu.matmul %0, %19, %cst_19 {dimension_numbers = #tpu.dot_dimension_numbers<[1], [0], [0], [1], [0, 0, 1, 1], [], []>} : vector<128x128xf32>, vector<128x128xf32>, vector<128x128xf32> -> vector<128x128xf32>
    %c0_20 = arith.constant 0 : index
    %c0_21 = arith.constant 0 : index
    %21 = vector.load %arg8[%c0_20, %c0_21] : memref<1x128xf32, #tpu.memory_space<vmem>>, vector<1x128xf32>
    %22 = vector.broadcast %21 : vector<1x128xf32> to vector<128x128xf32>
    %23 = arith.addf %20, %22 : vector<128x128xf32>
    %c0_22 = arith.constant 0 : index
    %c0_23 = arith.constant 0 : index
    %24 = vector.load %arg9[%c0_22, %c0_23] : memref<128x128xf32, #tpu.memory_space<vmem>>, vector<128x128xf32>
    tpu.vector_store %arg9[%c0_22, %c0_23], %23 {strides = array<i32>} : memref<128x128xf32, #tpu.memory_space<vmem>>, vector<128x128xf32>,
    return
  }
  func.func @transform_0(%arg0: i32) -> (i32, i32) {
    %c0_i32 = arith.constant 0 : i32
    %c0_i32_0 = arith.constant 0 : i32
    %c0_i32_1 = arith.constant 0 : i32
    return %c0_i32, %c0_i32_0 : i32, i32
  }
  func.func @transform_1(%arg0: i32) -> (i32, i32) {
    %c0_i32 = arith.constant 0 : i32
    %c0_i32_0 = arith.constant 0 : i32
    %c0_i32_1 = arith.constant 0 : i32
    return %c0_i32, %c0_i32_0 : i32, i32
  }
  func.func @transform_2(%arg0: i32) -> (i32, i32) {
    %c0_i32 = arith.constant 0 : i32
    %c0_i32_0 = arith.constant 0 : i32
    %c0_i32_1 = arith.constant 0 : i32
    return %c0_i32, %c0_i32_0 : i32, i32
  }
  func.func @transform_3(%arg0: i32) -> (i32, i32) {
    %c0_i32 = arith.constant 0 : i32
    %c0_i32_0 = arith.constant 0 : i32
    %c0_i32_1 = arith.constant 0 : i32
    return %c0_i32, %c0_i32_0 : i32, i32
  }
  func.func @transform_4(%arg0: i32) -> (i32, i32) {
    %c0_i32 = arith.constant 0 : i32
    %c0_i32_0 = arith.constant 0 : i32
    %c0_i32_1 = arith.constant 0 : i32
    return %c0_i32, %c0_i32_0 : i32, i32
  }
  func.func @transform_5(%arg0: i32) -> (i32, i32) {
    %c0_i32 = arith.constant 0 : i32
    %c0_i32_0 = arith.constant 0 : i32
    %c0_i32_1 = arith.constant 0 : i32
    return %c0_i32, %c0_i32_0 : i32, i32
  }
  func.func @transform_6(%arg0: i32) -> (i32, i32) {
    %c0_i32 = arith.constant 0 : i32
    %c0_i32_0 = arith.constant 0 : i32
    %c0_i32_1 = arith.constant 0 : i32
    return %c0_i32, %c0_i32_0 : i32, i32
  }
  func.func @transform_7(%arg0: i32) -> (i32, i32) {
    %c0_i32 = arith.constant 0 : i32
    %c0_i32_0 = arith.constant 0 : i32
    %c0_i32_1 = arith.constant 0 : i32
    return %c0_i32, %c0_i32_0 : i32, i32
  }
  func.func @transform_8(%arg0: i32) -> (i32, i32) {
    %c0_i32 = arith.constant 0 : i32
    %c0_i32_0 = arith.constant 0 : i32
    %c0_i32_1 = arith.constant 0 : i32
    return %c0_i32, %c0_i32_0 : i32, i32
  }
}

</mosaic_0001>

<llo_original>
// kernel: tpu_custom_call.1
$region0: #{tpu_custom_call.1}
  #allocation0 [shape = 'u32[]', space=smem, size = 0x4, offset = 0x4, fixed_abs, tag = 'smem constant byte address 0x4 - core index']
  #allocation1 [shape = 'u32[144,128]{1,0:T(1,128)}', space=vmem, size = 0x12000, scoped, tag = 'internal scratch']
  %s0 = inlined_call_operand.hbm [shape: f32[128,128], index: 0, kind: input, shape index: {}]
  %s1 = inlined_call_operand.hbm [shape: f32[128,128], index: 1, kind: input, shape index: {}]
  %s2 = inlined_call_operand.hbm [shape: f32[128,128], index: 2, kind: input, shape index: {}]
  %s3 = inlined_call_operand.vmem [shape: f32[1,128], index: 3, kind: input, shape index: {}]
  %s4 = inlined_call_operand.hbm [shape: f32[128,128], index: 4, kind: input, shape index: {}]
  %s5 = inlined_call_operand.vmem [shape: f32[1,128], index: 5, kind: input, shape index: {}]
  %s6 = inlined_call_operand.hbm [shape: f32[128,128], index: 6, kind: input, shape index: {}]
  %s7 = inlined_call_operand.vmem [shape: f32[1,128], index: 7, kind: input, shape index: {}]
  %s8 = inlined_call_operand.hbm [shape: f32[128,128], index: 8, kind: output, shape index: {}]
  %s9 = sld [smem:[#allocation0]]
  $region62: #{tpu_custom_call.1} parent=0
    _
  %s11 = ssub.s32 1, %s9
  %s12 = scalar_select 0, %s11, %s9
  $region1: #{tpu_custom_call.1} parent=0
    #allocation2 [shape = 'u8[65536]{0}', space=vmem, size = 0x10000, scoped, tag = 'input window, operand 0, single buffered']
    #allocation3 [shape = 's32[1]{0}', space=sflag, size = 0x4, scoped, tag = 'scoped memory for tpu_custom_call.1']
    #allocation4 [shape = 's32[1]{0}', space=sflag, size = 0x4, scoped, tag = 'scoped memory for tpu_custom_call.1']
    #allocation5 [shape = 'u8[65536]{0}', space=vmem, size = 0x10000, scoped, tag = 'input window, operand 1, single buffered']
    #allocation6 [shape = 's32[1]{0}', space=sflag, size = 0x4, scoped, tag = 'scoped memory for tpu_custom_call.1']
    #allocation7 [shape = 'u8[65536]{0}', space=vmem, size = 0x10000, scoped, tag = 'input window, operand 2, single buffered']
    #allocation8 [shape = 'u8[65536]{0}', space=vmem, size = 0x10000, scoped, tag = 'input window, operand 4, single buffered']
    #allocation9 [shape = 's32[1]{0}', space=sflag, size = 0x4, scoped, tag = 'scoped memory for tpu_custom_call.1']
    #allocation10 [shape = 'u8[65536]{0}', space=vmem, size = 0x10000, scoped, tag = 'input window, operand 6, single buffered']
    #allocation11 [shape = 'u8[65536]{0}', space=vmem, size = 0x10000, scoped, tag = 'output window, operand 0, single buffered']
    %13 = vsyncpa [#allocation3], 0
    %14 = vsyncpa [#allocation6], 0
    %15 = vsyncpa [#allocation9], 0
    %16 = vsyncpa [#allocation4], 0
    // Predicated region
    $region2: #{tpu_custom_call.1} parent=1 // pred_check
      _
    $region3: #{tpu_custom_call.1} parent=1 // pred_check_branch
      %18 = sbr.rel (0) target = $region5
    $region4: #{tpu_custom_call.1} parent=1 // pred_region
      %s20 = ssub.s32 2048, 2048
      %21 = vsyncadd [#allocation3], %s20
      %s22 = sshll.u32 [#allocation2], 4
      %s23 = int_to_ptr.vmem [resolvable:$true] %s22
      %28 = dma.hbm_to_vmem [thread:$0]  %s0, 2048, %s23, [#allocation3], 128, 128, 8
    $region5: #{tpu_custom_call.1} parent=1 // pred_fallthru
      _
    // Predicated region
    $region6: #{tpu_custom_call.1} parent=1 // pred_check
      _
    $region7: #{tpu_custom_call.1} parent=1 // pred_check_branch
      %30 = sbr.rel (0) target = $region9
    $region8: #{tpu_custom_call.1} parent=1 // pred_region
      %s32 = ssub.s32 2048, 2048
      %33 = vsyncadd [#allocation6], %s32
      %s34 = sshll.u32 [#allocation5], 4
      %s35 = int_to_ptr.vmem [resolvable:$true] %s34
      %40 = dma.hbm_to_vmem [thread:$0]  %s1, 2048, %s35, [#allocation6], 128, 128, 8
    $region9: #{tpu_custom_call.1} parent=1 // pred_fallthru
      _
    // Predicated region
    $region10: #{tpu_custom_call.1} parent=1 // pred_check
      _
    $region11: #{tpu_custom_call.1} parent=1 // pred_check_branch
      %42 = sbr.rel (0) target = $region13
    $region12: #{tpu_custom_call.1} parent=1 // pred_region
      %s44 = ssub.s32 2048, 2048
      %45 = vsyncadd [#allocation6], %s44
      %s46 = sshll.u32 [#allocation7], 4
      %s47 = int_to_ptr.vmem [resolvable:$true] %s46
      %52 = dma.hbm_to_vmem [thread:$0]  %s2, 2048, %s47, [#allocation6], 128, 128, 8
    $region13: #{tpu_custom_call.1} parent=1 // pred_fallthru
      _
    // Predicated region
    $region14: #{tpu_custom_call.1} parent=1 // pred_check
      _
    $region15: #{tpu_custom_call.1} parent=1 // pred_check_branch
      %54 = sbr.rel (0) target = $region17
    $region16: #{tpu_custom_call.1} parent=1 // pred_region
      _
    $region17: #{tpu_custom_call.1} parent=1 // pred_fallthru
      _
    // Predicated region
    $region18: #{tpu_custom_call.1} parent=1 // pred_check
      _
    $region19: #{tpu_custom_call.1} parent=1 // pred_check_branch
      %56 = sbr.rel (0) target = $region21
    $region20: #{tpu_custom_call.1} parent=1 // pred_region
      %s58 = ssub.s32 2048, 2048
      %59 = vsyncadd [#allocation9], %s58
      %s60 = sshll.u32 [#allocation8], 4
      %s61 = int_to_ptr.vmem [resolvable:$true] %s60
      %66 = dma.hbm_to_vmem [thread:$0]  %s4, 2048, %s61, [#allocation9], 128, 128, 8
    $region21: #{tpu_custom_call.1} parent=1 // pred_fallthru
      _
    // Predicated region
    $region22: #{tpu_custom_call.1} parent=1 // pred_check
      _
    $region23: #{tpu_custom_call.1} parent=1 // pred_check_branch
      %68 = sbr.rel (0) target = $region25
    $region24: #{tpu_custom_call.1} parent=1 // pred_region
      _
    $region25: #{tpu_custom_call.1} parent=1 // pred_fallthru
      _
    // Predicated region
    $region26: #{tpu_custom_call.1} parent=1 // pred_check
      _
    $region27: #{tpu_custom_call.1} parent=1 // pred_check_branch
      %70 = sbr.rel (0) target = $region29
    $region28: #{tpu_custom_call.1} parent=1 // pred_region
      %s72 = ssub.s32 2048, 2048
      %73 = vsyncadd [#allocation9], %s72
      %s74 = sshll.u32 [#allocation10], 4
      %s75 = int_to_ptr.vmem [resolvable:$true] %s74
      %80 = dma.hbm_to_vmem [thread:$0]  %s6, 2048, %s75, [#allocation9], 128, 128, 8
    $region29: #{tpu_custom_call.1} parent=1 // pred_fallthru
      _
    // Predicated region
    $region30: #{tpu_custom_call.1} parent=1 // pred_check
      _
    $region31: #{tpu_custom_call.1} parent=1 // pred_check_branch
      %82 = sbr.rel (0) target = $region33
    $region32: #{tpu_custom_call.1} parent=1 // pred_region
      _
    $region33: #{tpu_custom_call.1} parent=1 // pred_fallthru
      _
    // Predicated region
    $region34: #{tpu_custom_call.1} parent=1 // pred_check
      _
    $region35: #{tpu_custom_call.1} parent=1 // pred_check_branch
      %84 = sbr.rel (0) target = $region37
    $region36: #{tpu_custom_call.1} parent=1 // pred_region
      %85 = dma.done [#allocation3], 2048
    $region37: #{tpu_custom_call.1} parent=1 // pred_fallthru
      _
    // Predicated region
    $region38: #{tpu_custom_call.1} parent=1 // pred_check
      _
    $region39: #{tpu_custom_call.1} parent=1 // pred_check_branch
      %87 = sbr.rel (0) target = $region41
    $region40: #{tpu_custom_call.1} parent=1 // pred_region
      %88 = dma.done [#allocation6], 2048
    $region41: #{tpu_custom_call.1} parent=1 // pred_fallthru
      _
    // Predicated region
    $region42: #{tpu_custom_call.1} parent=1 // pred_check
      _
    $region43: #{tpu_custom_call.1} parent=1 // pred_check_branch
      %90 = sbr.rel (0) target = $region45
    $region44: #{tpu_custom_call.1} parent=1 // pred_region
      %91 = dma.done [#allocation6], 2048
    $region45: #{tpu_custom_call.1} parent=1 // pred_fallthru
      _
    // Predicated region
    $region46: #{tpu_custom_call.1} parent=1 // pred_check
      _
    $region47: #{tpu_custom_call.1} parent=1 // pred_check_branch
      %93 = sbr.rel (0) target = $region49
    $region48: #{tpu_custom_call.1} parent=1 // pred_region
      %94 = dma.done [#allocation9], 2048
    $region49: #{tpu_custom_call.1} parent=1 // pred_fallthru
      _
    // Predicated region
    $region50: #{tpu_custom_call.1} parent=1 // pred_check
      _
    $region51: #{tpu_custom_call.1} parent=1 // pred_check_branch
      %96 = sbr.rel (0) target = $region53
    $region52: #{tpu_custom_call.1} parent=1 // pred_region
      %97 = dma.done [#allocation9], 2048
    $region53: #{tpu_custom_call.1} parent=1 // pred_fallthru
      _
    %v98 = vld [vmem:[#allocation2] sm:$0xff]
    %v99 = vld [vmem:[#allocation2 + $0x8] sm:$0xff]
    %v100 = vld [vmem:[#allocation2 + $0x10] sm:$0xff]
    %v101 = vld [vmem:[#allocation2 + $0x18] sm:$0xff]
    %v102 = vld [vmem:[#allocation2 + $0x20] sm:$0xff]
    %v103 = vld [vmem:[#allocation2 + $0x28] sm:$0xff]
    %v104 = vld [vmem:[#allocation2 + $0x30] sm:$0xff]
    %v105 = vld [vmem:[#allocation2 + $0x38] sm:$0xff]
    %v106 = vld [vmem:[#allocation2 + $0x40] sm:$0xff]
    %v107 = vld [vmem:[#allocation2 + $0x48] sm:$0xff]
    %v108 = vld [vmem:[#allocation2 + $0x50] sm:$0xff]
    %v109 = vld [vmem:[#allocation2 + $0x58] sm:$0xff]
    %v110 = vld [vmem:[#allocation2 + $0x60] sm:$0xff]
    %v111 = vld [vmem:[#allocation2 + $0x68] sm:$0xff]
    %v112 = vld [vmem:[#allocation2 + $0x70] sm:$0xff]
    %v113 = vld [vmem:[#allocation2 + $0x78] sm:$0xff]
    %v114 = vld [vmem:[#allocation5] sm:$0xff]
    %v115 = vld [vmem:[#allocation5 + $0x8] sm:$0xff]
    %v116 = vld [vmem:[#allocation5 + $0x10] sm:$0xff]
    %v117 = vld [vmem:[#allocation5 + $0x18] sm:$0xff]
    %v118 = vld [vmem:[#allocation5 + $0x20] sm:$0xff]
    %v119 = vld [vmem:[#allocation5 + $0x28] sm:$0xff]
    %v120 = vld [vmem:[#allocation5 + $0x30] sm:$0xff]
    %v121 = vld [vmem:[#allocation5 + $0x38] sm:$0xff]
    %v122 = vld [vmem:[#allocation5 + $0x40] sm:$0xff]
    %v123 = vld [vmem:[#allocation5 + $0x48] sm:$0xff]
    %v124 = vld [vmem:[#allocation5 + $0x50] sm:$0xff]
    %v125 = vld [vmem:[#allocation5 + $0x58] sm:$0xff]
    %v126 = vld [vmem:[#allocation5 + $0x60] sm:$0xff]
    %v127 = vld [vmem:[#allocation5 + $0x68] sm:$0xff]
    %v128 = vld [vmem:[#allocation5 + $0x70] sm:$0xff]
    %v129 = vld [vmem:[#allocation5 + $0x78] sm:$0xff]
    %v130 = vld [vmem:[#allocation7] sm:$0xff]
    %v131 = vld [vmem:[#allocation7 + $0x8] sm:$0xff]
    %v132 = vld [vmem:[#allocation7 + $0x10] sm:$0xff]
    %v133 = vld [vmem:[#allocation7 + $0x18] sm:$0xff]
    %v134 = vld [vmem:[#allocation7 + $0x20] sm:$0xff]
    %v135 = vld [vmem:[#allocation7 + $0x28] sm:$0xff]
    %v136 = vld [vmem:[#allocation7 + $0x30] sm:$0xff]
    %v137 = vld [vmem:[#allocation7 + $0x38] sm:$0xff]
    %v138 = vld [vmem:[#allocation7 + $0x40] sm:$0xff]
    %v139 = vld [vmem:[#allocation7 + $0x48] sm:$0xff]
    %v140 = vld [vmem:[#allocation7 + $0x50] sm:$0xff]
    %v141 = vld [vmem:[#allocation7 + $0x58] sm:$0xff]
    %v142 = vld [vmem:[#allocation7 + $0x60] sm:$0xff]
    %v143 = vld [vmem:[#allocation7 + $0x68] sm:$0xff]
    %v144 = vld [vmem:[#allocation7 + $0x70] sm:$0xff]
    %v145 = vld [vmem:[#allocation7 + $0x78] sm:$0xff]
    %146 = vmatprep.subr.mxu0 0.0
    %147 = vmatpush1.msra.mxu0 %v130
    %148 = vmatprep.subr.mxu0 0.0
    %149 = vmatpush1.msra.mxu0 %v131
    %150 = vmatprep.subr.mxu0 0.0
    %151 = vmatpush1.msra.mxu0 %v132
    %152 = vmatprep.subr.mxu0 0.0
    %153 = vmatpush1.msra.mxu0 %v133
    %154 = vmatprep.subr.mxu0 0.0
    %155 = vmatpush1.msra.mxu0 %v134
    %156 = vmatprep.subr.mxu0 0.0
    %157 = vmatpush1.msra.mxu0 %v135
    %158 = vmatprep.subr.mxu0 0.0
    %159 = vmatpush1.msra.mxu0 %v136
    %160 = vmatprep.subr.mxu0 0.0
    %161 = vmatpush1.msra.mxu0 %v137
    %162 = vmatprep.subr.mxu0 0.0
    %163 = vmatpush1.msra.mxu0 %v138
    %164 = vmatprep.subr.mxu0 0.0
    %165 = vmatpush1.msra.mxu0 %v139
    %166 = vmatprep.subr.mxu0 0.0
    %167 = vmatpush1.msra.mxu0 %v140
    %168 = vmatprep.subr.mxu0 0.0
    %169 = vmatpush1.msra.mxu0 %v141
    %170 = vmatprep.subr.mxu0 0.0
    %171 = vmatpush1.msra.mxu0 %v142
    %172 = vmatprep.subr.mxu0 0.0
    %173 = vmatpush1.msra.mxu0 %v143
    %174 = vmatprep.subr.mxu0 0.0
    %175 = vmatpush1.msra.mxu0 %v144
    %176 = vmatprep.subr.mxu0 0.0
    %177 = vmatpush1.msra.mxu0 %v145
    %178 = vmatprep.subr.mxu0 0.0
    %179 = vmatpush1.msra.mxu0 0.0
    %180 = vmatprep.subr.mxu0 0.0
    %181 = vmatpush1.msra.mxu0 0.0
    %182 = vmatprep.subr.mxu0 0.0
    %183 = vmatpush1.msra.mxu0 0.0
    %184 = vmatprep.subr.mxu0 0.0
    %185 = vmatpush1.msra.mxu0 0.0
    %186 = vmatprep.subr.mxu0 0.0
    %187 = vmatpush1.msra.mxu0 0.0
    %188 = vmatprep.subr.mxu0 0.0
    %189 = vmatpush1.msra.mxu0 0.0
    %190 = vmatprep.subr.mxu0 0.0
    %191 = vmatpush1.msra.mxu0 0.0
    %192 = vmatprep.subr.mxu0 0.0
    %193 = vmatpush1.msra.mxu0 0.0
    %194 = vmatprep.subr.mxu0 0.0
    %195 = vmatpush1.msra.mxu0 0.0
    %196 = vmatprep.subr.mxu0 0.0
    %197 = vmatpush1.msra.mxu0 0.0
    %198 = vmatprep.subr.mxu0 0.0
    %199 = vmatpush1.msra.mxu0 0.0
    %200 = vmatprep.subr.mxu0 0.0
    %201 = vmatpush1.msra.mxu0 0.0
    %202 = vmatprep.subr.mxu0 0.0
    %203 = vmatpush1.msra.mxu0 0.0
    %204 = vmatprep.subr.mxu0 0.0
    %205 = vmatpush1.msra.mxu0 0.0
    %206 = vmatprep.subr.mxu0 0.0
    %207 = vmatpush1.msra.mxu0 0.0
    %208 = vmatprep.subr.mxu0 0.0
    %209 = vmatpush1.msra.mxu0 0.0
    %210 = vmatprep.mubr.f32.mxu0 0.0
    %211 = vmatmul.mubr.f32.gmra.mrb[0].mxu0 %v114
    %v212 = vpop.f32.mrb[0].mxu0
    %v213 = vadd.f32 0.0, %v212
    %v214 = vpop.f32.mrb[0].mxu0
    %215 = vmatprep.mubr.f32.mxu0 0.0
    %216 = vmatmul.mubr.f32.gmra.mrb[0].mxu0 %v115
    %v217 = vpop.f32.mrb[0].mxu0
    %v218 = vadd.f32 0.0, %v217
    %v219 = vpop.f32.mrb[0].mxu0
    %220 = vmatprep.mubr.f32.mxu0 0.0
    %221 = vmatmul.mubr.f32.gmra.mrb[0].mxu0 %v116
    %v222 = vpop.f32.mrb[0].mxu0
    %v223 = vadd.f32 0.0, %v222
    %v224 = vpop.f32.mrb[0].mxu0
    %225 = vmatprep.mubr.f32.mxu0 0.0
    %226 = vmatmul.mubr.f32.gmra.mrb[0].mxu0 %v117
    %v227 = vpop.f32.mrb[0].mxu0
    %v228 = vadd.f32 0.0, %v227
    %v229 = vpop.f32.mrb[0].mxu0
    %230 = vmatprep.mubr.f32.mxu0 0.0
    %231 = vmatmul.mubr.f32.gmra.mrb[0].mxu0 %v118
    %v232 = vpop.f32.mrb[0].mxu0
    %v233 = vadd.f32 0.0, %v232
    %v234 = vpop.f32.mrb[0].mxu0
    %235 = vmatprep.mubr.f32.mxu0 0.0
    %236 = vmatmul.mubr.f32.gmra.mrb[0].mxu0 %v119
    %v237 = vpop.f32.mrb[0].mxu0
    %v238 = vadd.f32 0.0, %v237
    %v239 = vpop.f32.mrb[0].mxu0
    %240 = vmatprep.mubr.f32.mxu0 0.0
    %241 = vmatmul.mubr.f32.gmra.mrb[0].mxu0 %v120
    %v242 = vpop.f32.mrb[0].mxu0
    %v243 = vadd.f32 0.0, %v242
    %v244 = vpop.f32.mrb[0].mxu0
    %245 = vmatprep.mubr.f32.mxu0 0.0
    %246 = vmatmul.mubr.f32.gmra.mrb[0].mxu0 %v121
    %v247 = vpop.f32.mrb[0].mxu0
    %v248 = vadd.f32 0.0, %v247
    %v249 = vpop.f32.mrb[0].mxu0
    %250 = vmatprep.mubr.f32.mxu0 0.0
    %251 = vmatmul.mubr.f32.gmra.mrb[0].mxu0 %v122
    %v252 = vpop.f32.mrb[0].mxu0
    %v253 = vadd.f32 0.0, %v252
    %v254 = vpop.f32.mrb[0].mxu0
    %255 = vmatprep.mubr.f32.mxu0 0.0
    %256 = vmatmul.mubr.f32.gmra.mrb[0].mxu0 %v123
    %v257 = vpop.f32.mrb[0].mxu0
    %v258 = vadd.f32 0.0, %v257
    %v259 = vpop.f32.mrb[0].mxu0
    %260 = vmatprep.mubr.f32.mxu0 0.0
    %261 = vmatmul.mubr.f32.gmra.mrb[0].mxu0 %v124
    %v262 = vpop.f32.mrb[0].mxu0
    %v263 = vadd.f32 0.0, %v262
    %v264 = vpop.f32.mrb[0].mxu0
    %265 = vmatprep.mubr.f32.mxu0 0.0
    %266 = vmatmul.mubr.f32.gmra.mrb[0].mxu0 %v125
    %v267 = vpop.f32.mrb[0].mxu0
    %v268 = vadd.f32 0.0, %v267
    %v269 = vpop.f32.mrb[0].mxu0
    %270 = vmatprep.mubr.f32.mxu0 0.0
    %271 = vmatmul.mubr.f32.gmra.mrb[0].mxu0 %v126
    %v272 = vpop.f32.mrb[0].mxu0
    %v273 = vadd.f32 0.0, %v272
    %v274 = vpop.f32.mrb[0].mxu0
    %275 = vmatprep.mubr.f32.mxu0 0.0
    %276 = vmatmul.mubr.f32.gmra.mrb[0].mxu0 %v127
    %v277 = vpop.f32.mrb[0].mxu0
    %v278 = vadd.f32 0.0, %v277
    %v279 = vpop.f32.mrb[0].mxu0
    %280 = vmatprep.mubr.f32.mxu0 0.0
    %281 = vmatmul.mubr.f32.gmra.mrb[0].mxu0 %v128
    %v282 = vpop.f32.mrb[0].mxu0
    %v283 = vadd.f32 0.0, %v282
    %v284 = vpop.f32.mrb[0].mxu0
    %285 = vmatprep.mubr.f32.mxu0 0.0
    %286 = vmatmul.mubr.f32.gmra.mrb[0].mxu0 %v129
    %v287 = vpop.f32.mrb[0].mxu0
    %v288 = vadd.f32 0.0, %v287
    %v289 = vpop.f32.mrb[0].mxu0
    %290 = vdwg.mxu0
    %v291 = vld [vmem:[%s3] sm:$0x1]
    %v293 = vlaneseq
    %v294 = vshrl.u32 %v293, 7
    %v295 = vsub.s32 0, %v294
    %v296 = vrot.slane %v291, %v295
    %298 = vmatprep.subr.mxu0 0.0
    %299 = vmatpush1.msra.mxu0 %v213
    %300 = vmatprep.subr.mxu0 0.0
    %301 = vmatpush1.msra.mxu0 %v218
    %302 = vmatprep.subr.mxu0 0.0
    %303 = vmatpush1.msra.mxu0 %v223
    %304 = vmatprep.subr.mxu0 0.0
    %305 = vmatpush1.msra.mxu0 %v228
    %306 = vmatprep.subr.mxu0 0.0
    %307 = vmatpush1.msra.mxu0 %v233
    %308 = vmatprep.subr.mxu0 0.0
    %309 = vmatpush1.msra.mxu0 %v238
    %310 = vmatprep.subr.mxu0 0.0
    %311 = vmatpush1.msra.mxu0 %v243
    %312 = vmatprep.subr.mxu0 0.0
    %313 = vmatpush1.msra.mxu0 %v248
    %314 = vmatprep.subr.mxu0 0.0
    %315 = vmatpush1.msra.mxu0 %v253
    %316 = vmatprep.subr.mxu0 0.0
    %317 = vmatpush1.msra.mxu0 %v258
    %318 = vmatprep.subr.mxu0 0.0
    %319 = vmatpush1.msra.mxu0 %v263
    %320 = vmatprep.subr.mxu0 0.0
    %321 = vmatpush1.msra.mxu0 %v268
    %322 = vmatprep.subr.mxu0 0.0
    %323 = vmatpush1.msra.mxu0 %v273
    %324 = vmatprep.subr.mxu0 0.0
    %325 = vmatpush1.msra.mxu0 %v278
    %326 = vmatprep.subr.mxu0 0.0
    %327 = vmatpush1.msra.mxu0 %v283
    %328 = vmatprep.subr.mxu0 0.0
    %329 = vmatpush1.msra.mxu0 %v288
    %330 = vmatprep.subr.mxu0 0.0
    %331 = vmatpush1.msra.mxu0 0.0
    %332 = vmatprep.subr.mxu0 0.0
    %333 = vmatpush1.msra.mxu0 0.0
    %334 = vmatprep.subr.mxu0 0.0
    %335 = vmatpush1.msra.mxu0 0.0
    %336 = vmatprep.subr.mxu0 0.0
    %337 = vmatpush1.msra.mxu0 0.0
    %338 = vmatprep.subr.mxu0 0.0
    %339 = vmatpush1.msra.mxu0 0.0
    %340 = vmatprep.subr.mxu0 0.0
    %341 = vmatpush1.msra.mxu0 0.0
    %342 = vmatprep.subr.mxu0 0.0
    %343 = vmatpush1.msra.mxu0 0.0
    %344 = vmatprep.subr.mxu0 0.0
    %345 = vmatpush1.msra.mxu0 0.0
    %346 = vmatprep.subr.mxu0 0.0
    %347 = vmatpush1.msra.mxu0 0.0
    %348 = vmatprep.subr.mxu0 0.0
    %349 = vmatpush1.msra.mxu0 0.0
    %350 = vmatprep.subr.mxu0 0.0
    %351 = vmatpush1.msra.mxu0 0.0
    %352 = vmatprep.subr.mxu0 0.0
    %353 = vmatpush1.msra.mxu0 0.0
    %354 = vmatprep.subr.mxu0 0.0
    %355 = vmatpush1.msra.mxu0 0.0
    %356 = vmatprep.subr.mxu0 0.0
    %357 = vmatpush1.msra.mxu0 0.0
    %358 = vmatprep.subr.mxu0 0.0
    %359 = vmatpush1.msra.mxu0 0.0
    %360 = vmatprep.subr.mxu0 0.0
    %361 = vmatpush1.msra.mxu0 0.0
    %362 = vmatprep.mubr.f32.mxu0 0.0
    %363 = vmatmul.mubr.f32.gmra.mrb[0].mxu0 %v98
    %v364 = vpop.f32.mrb[0].mxu0
    %v365 = vadd.f32 %v296, %v364
    %v366 = vpop.f32.mrb[0].mxu0
    %367 = vmatprep.mubr.f32.mxu0 0.0
    %368 = vmatmul.mubr.f32.gmra.mrb[0].mxu0 %v99
    %v369 = vpop.f32.mrb[0].mxu0
    %v370 = vadd.f32 %v296, %v369
    %v371 = vpop.f32.mrb[0].mxu0
    %372 = vmatprep.mubr.f32.mxu0 0.0
    %373 = vmatmul.mubr.f32.gmra.mrb[0].mxu0 %v100
    %v374 = vpop.f32.mrb[0].mxu0
    %v375 = vadd.f32 %v296, %v374
    %v376 = vpop.f32.mrb[0].mxu0
    %377 = vmatprep.mubr.f32.mxu0 0.0
    %378 = vmatmul.mubr.f32.gmra.mrb[0].mxu0 %v101
    %v379 = vpop.f32.mrb[0].mxu0
    %v380 = vadd.f32 %v296, %v379
    %v381 = vpop.f32.mrb[0].mxu0
    %382 = vmatprep.mubr.f32.mxu0 0.0
    %383 = vmatmul.mubr.f32.gmra.mrb[0].mxu0 %v102
    %v384 = vpop.f32.mrb[0].mxu0
    %v385 = vadd.f32 %v296, %v384
    %v386 = vpop.f32.mrb[0].mxu0
    %387 = vmatprep.mubr.f32.mxu0 0.0
    %388 = vmatmul.mubr.f32.gmra.mrb[0].mxu0 %v103
    %v389 = vpop.f32.mrb[0].mxu0
    %v390 = vadd.f32 %v296, %v389
    %v391 = vpop.f32.mrb[0].mxu0
    %392 = vmatprep.mubr.f32.mxu0 0.0
    %393 = vmatmul.mubr.f32.gmra.mrb[0].mxu0 %v104
    %v394 = vpop.f32.mrb[0].mxu0
    %v395 = vadd.f32 %v296, %v394
    %v396 = vpop.f32.mrb[0].mxu0
    %397 = vmatprep.mubr.f32.mxu0 0.0
    %398 = vmatmul.mubr.f32.gmra.mrb[0].mxu0 %v105
    %v399 = vpop.f32.mrb[0].mxu0
    %v400 = vadd.f32 %v296, %v399
    %v401 = vpop.f32.mrb[0].mxu0
    %402 = vmatprep.mubr.f32.mxu0 0.0
    %403 = vmatmul.mubr.f32.gmra.mrb[0].mxu0 %v106
    %v404 = vpop.f32.mrb[0].mxu0
    %v405 = vadd.f32 %v296, %v404
    %v406 = vpop.f32.mrb[0].mxu0
    %407 = vmatprep.mubr.f32.mxu0 0.0
    %408 = vmatmul.mubr.f32.gmra.mrb[0].mxu0 %v107
    %v409 = vpop.f32.mrb[0].mxu0
    %v410 = vadd.f32 %v296, %v409
    %v411 = vpop.f32.mrb[0].mxu0
    %412 = vmatprep.mubr.f32.mxu0 0.0
    %413 = vmatmul.mubr.f32.gmra.mrb[0].mxu0 %v108
    %v414 = vpop.f32.mrb[0].mxu0
    %v415 = vadd.f32 %v296, %v414
    %v416 = vpop.f32.mrb[0].mxu0
    %417 = vmatprep.mubr.f32.mxu0 0.0
    %418 = vmatmul.mubr.f32.gmra.mrb[0].mxu0 %v109
    %v419 = vpop.f32.mrb[0].mxu0
    %v420 = vadd.f32 %v296, %v419
    %v421 = vpop.f32.mrb[0].mxu0
    %422 = vmatprep.mubr.f32.mxu0 0.0
    %423 = vmatmul.mubr.f32.gmra.mrb[0].mxu0 %v110
    %v424 = vpop.f32.mrb[0].mxu0
    %v425 = vadd.f32 %v296, %v424
    %v426 = vpop.f32.mrb[0].mxu0
    %427 = vmatprep.mubr.f32.mxu0 0.0
    %428 = vmatmul.mubr.f32.gmra.mrb[0].mxu0 %v111
    %v429 = vpop.f32.mrb[0].mxu0
    %v430 = vadd.f32 %v296, %v429
    %v431 = vpop.f32.mrb[0].mxu0
    %432 = vmatprep.mubr.f32.mxu0 0.0
    %433 = vmatmul.mubr.f32.gmra.mrb[0].mxu0 %v112
    %v434 = vpop.f32.mrb[0].mxu0
    %v435 = vadd.f32 %v296, %v434
    %v436 = vpop.f32.mrb[0].mxu0
    %437 = vmatprep.mubr.f32.mxu0 0.0
    %438 = vmatmul.mubr.f32.gmra.mrb[0].mxu0 %v113
    %v439 = vpop.f32.mrb[0].mxu0
    %v440 = vadd.f32 %v296, %v439
    %v441 = vpop.f32.mrb[0].mxu0
    %442 = vdwg.mxu0
    %v443 = vmax.f32 %v365, 0.0
    %v444 = vmax.f32 %v370, 0.0
    %v445 = vmax.f32 %v375, 0.0
    %v446 = vmax.f32 %v380, 0.0
    %v447 = vmax.f32 %v385, 0.0
    %v448 = vmax.f32 %v390, 0.0
    %v449 = vmax.f32 %v395, 0.0
    %v450 = vmax.f32 %v400, 0.0
    %v451 = vmax.f32 %v405, 0.0
    %v452 = vmax.f32 %v410, 0.0
    %v453 = vmax.f32 %v415, 0.0
    %v454 = vmax.f32 %v420, 0.0
    %v455 = vmax.f32 %v425, 0.0
    %v456 = vmax.f32 %v430, 0.0
    %v457 = vmax.f32 %v435, 0.0
    %v458 = vmax.f32 %v440, 0.0
    %v459 = vld [vmem:[#allocation8] sm:$0xff]
    %v460 = vld [vmem:[#allocation8 + $0x8] sm:$0xff]
    %v461 = vld [vmem:[#allocation8 + $0x10] sm:$0xff]
    %v462 = vld [vmem:[#allocation8 + $0x18] sm:$0xff]
    %v463 = vld [vmem:[#allocation8 + $0x20] sm:$0xff]
    %v464 = vld [vmem:[#allocation8 + $0x28] sm:$0xff]
    %v465 = vld [vmem:[#allocation8 + $0x30] sm:$0xff]
    %v466 = vld [vmem:[#allocation8 + $0x38] sm:$0xff]
    %v467 = vld [vmem:[#allocation8 + $0x40] sm:$0xff]
    %v468 = vld [vmem:[#allocation8 + $0x48] sm:$0xff]
    %v469 = vld [vmem:[#allocation8 + $0x50] sm:$0xff]
    %v470 = vld [vmem:[#allocation8 + $0x58] sm:$0xff]
    %v471 = vld [vmem:[#allocation8 + $0x60] sm:$0xff]
    %v472 = vld [vmem:[#allocation8 + $0x68] sm:$0xff]
    %v473 = vld [vmem:[#allocation8 + $0x70] sm:$0xff]
    %v474 = vld [vmem:[#allocation8 + $0x78] sm:$0xff]
    %475 = vmatprep.subr.mxu0 0.0
    %476 = vmatpush1.msra.mxu0 %v459
    %477 = vmatprep.subr.mxu0 0.0
    %478 = vmatpush1.msra.mxu0 %v460
    %479 = vmatprep.subr.mxu0 0.0
    %480 = vmatpush1.msra.mxu0 %v461
    %481 = vmatprep.subr.mxu0 0.0
    %482 = vmatpush1.msra.mxu0 %v462
    %483 = vmatprep.subr.mxu0 0.0
    %484 = vmatpush1.msra.mxu0 %v463
    %485 = vmatprep.subr.mxu0 0.0
    %486 = vmatpush1.msra.mxu0 %v464
    %487 = vmatprep.subr.mxu0 0.0
    %488 = vmatpush1.msra.mxu0 %v465
    %489 = vmatprep.subr.mxu0 0.0
    %490 = vmatpush1.msra.mxu0 %v466
    %491 = vmatprep.subr.mxu0 0.0
    %492 = vmatpush1.msra.mxu0 %v467
    %493 = vmatprep.subr.mxu0 0.0
    %494 = vmatpush1.msra.mxu0 %v468
    %495 = vmatprep.subr.mxu0 0.0
    %496 = vmatpush1.msra.mxu0 %v469
    %497 = vmatprep.subr.mxu0 0.0
    %498 = vmatpush1.msra.mxu0 %v470
    %499 = vmatprep.subr.mxu0 0.0
    %500 = vmatpush1.msra.mxu0 %v471
    %501 = vmatprep.subr.mxu0 0.0
    %502 = vmatpush1.msra.mxu0 %v472
    %503 = vmatprep.subr.mxu0 0.0
    %504 = vmatpush1.msra.mxu0 %v473
    %505 = vmatprep.subr.mxu0 0.0
    %506 = vmatpush1.msra.mxu0 %v474
    %507 = vmatprep.subr.mxu0 0.0
    %508 = vmatpush1.msra.mxu0 0.0
    %509 = vmatprep.subr.mxu0 0.0
    %510 = vmatpush1.msra.mxu0 0.0
    %511 = vmatprep.subr.mxu0 0.0
    %512 = vmatpush1.msra.mxu0 0.0
    %513 = vmatprep.subr.mxu0 0.0
    %514 = vmatpush1.msra.mxu0 0.0
    %515 = vmatprep.subr.mxu0 0.0
    %516 = vmatpush1.msra.mxu0 0.0
    %517 = vmatprep.subr.mxu0 0.0
    %518 = vmatpush1.msra.mxu0 0.0
    %519 = vmatprep.subr.mxu0 0.0
    %520 = vmatpush1.msra.mxu0 0.0
    %521 = vmatprep.subr.mxu0 0.0
    %522 = vmatpush1.msra.mxu0 0.0
    %523 = vmatprep.subr.mxu0 0.0
    %524 = vmatpush1.msra.mxu0 0.0
    %525 = vmatprep.subr.mxu0 0.0
    %526 = vmatpush1.msra.mxu0 0.0
    %527 = vmatprep.subr.mxu0 0.0
    %528 = vmatpush1.msra.mxu0 0.0
    %529 = vmatprep.subr.mxu0 0.0
    %530 = vmatpush1.msra.mxu0 0.0
    %531 = vmatprep.subr.mxu0 0.0
    %532 = vmatpush1.msra.mxu0 0.0
    %533 = vmatprep.subr.mxu0 0.0
    %534 = vmatpush1.msra.mxu0 0.0
    %535 = vmatprep.subr.mxu0 0.0
    %536 = vmatpush1.msra.mxu0 0.0
    %537 = vmatprep.subr.mxu0 0.0
    %538 = vmatpush1.msra.mxu0 0.0
    %539 = vmatprep.mubr.f32.mxu0 0.0
    %540 = vmatmul.mubr.f32.gmra.mrb[0].mxu0 %v443
    %v541 = vpop.f32.mrb[0].mxu0
    %v542 = vadd.f32 0.0, %v541
    %v543 = vpop.f32.mrb[0].mxu0
    %544 = vmatprep.mubr.f32.mxu0 0.0
    %545 = vmatmul.mubr.f32.gmra.mrb[0].mxu0 %v444
    %v546 = vpop.f32.mrb[0].mxu0
    %v547 = vadd.f32 0.0, %v546
    %v548 = vpop.f32.mrb[0].mxu0
    %549 = vmatprep.mubr.f32.mxu0 0.0
    %550 = vmatmul.mubr.f32.gmra.mrb[0].mxu0 %v445
    %v551 = vpop.f32.mrb[0].mxu0
    %v552 = vadd.f32 0.0, %v551
    %v553 = vpop.f32.mrb[0].mxu0
    %554 = vmatprep.mubr.f32.mxu0 0.0
    %555 = vmatmul.mubr.f32.gmra.mrb[0].mxu0 %v446
    %v556 = vpop.f32.mrb[0].mxu0
    %v557 = vadd.f32 0.0, %v556
    %v558 = vpop.f32.mrb[0].mxu0
    %559 = vmatprep.mubr.f32.mxu0 0.0
    %560 = vmatmul.mubr.f32.gmra.mrb[0].mxu0 %v447
    %v561 = vpop.f32.mrb[0].mxu0
    %v562 = vadd.f32 0.0, %v561
    %v563 = vpop.f32.mrb[0].mxu0
    %564 = vmatprep.mubr.f32.mxu0 0.0
    %565 = vmatmul.mubr.f32.gmra.mrb[0].mxu0 %v448
    %v566 = vpop.f32.mrb[0].mxu0
    %v567 = vadd.f32 0.0, %v566
    %v568 = vpop.f32.mrb[0].mxu0
    %569 = vmatprep.mubr.f32.mxu0 0.0
    %570 = vmatmul.mubr.f32.gmra.mrb[0].mxu0 %v449
    %v571 = vpop.f32.mrb[0].mxu0
    %v572 = vadd.f32 0.0, %v571
    %v573 = vpop.f32.mrb[0].mxu0
    %574 = vmatprep.mubr.f32.mxu0 0.0
    %575 = vmatmul.mubr.f32.gmra.mrb[0].mxu0 %v450
    %v576 = vpop.f32.mrb[0].mxu0
    %v577 = vadd.f32 0.0, %v576
    %v578 = vpop.f32.mrb[0].mxu0
    %579 = vmatprep.mubr.f32.mxu0 0.0
    %580 = vmatmul.mubr.f32.gmra.mrb[0].mxu0 %v451
    %v581 = vpop.f32.mrb[0].mxu0
    %v582 = vadd.f32 0.0, %v581
    %v583 = vpop.f32.mrb[0].mxu0
    %584 = vmatprep.mubr.f32.mxu0 0.0
    %585 = vmatmul.mubr.f32.gmra.mrb[0].mxu0 %v452
    %v586 = vpop.f32.mrb[0].mxu0
    %v587 = vadd.f32 0.0, %v586
    %v588 = vpop.f32.mrb[0].mxu0
    %589 = vmatprep.mubr.f32.mxu0 0.0
    %590 = vmatmul.mubr.f32.gmra.mrb[0].mxu0 %v453
    %v591 = vpop.f32.mrb[0].mxu0
    %v592 = vadd.f32 0.0, %v591
    %v593 = vpop.f32.mrb[0].mxu0
    %594 = vmatprep.mubr.f32.mxu0 0.0
    %595 = vmatmul.mubr.f32.gmra.mrb[0].mxu0 %v454
    %v596 = vpop.f32.mrb[0].mxu0
    %v597 = vadd.f32 0.0, %v596
    %v598 = vpop.f32.mrb[0].mxu0
    %599 = vmatprep.mubr.f32.mxu0 0.0
    %600 = vmatmul.mubr.f32.gmra.mrb[0].mxu0 %v455
    %v601 = vpop.f32.mrb[0].mxu0
    %v602 = vadd.f32 0.0, %v601
    %v603 = vpop.f32.mrb[0].mxu0
    %604 = vmatprep.mubr.f32.mxu0 0.0
    %605 = vmatmul.mubr.f32.gmra.mrb[0].mxu0 %v456
    %v606 = vpop.f32.mrb[0].mxu0
    %v607 = vadd.f32 0.0, %v606
    %v608 = vpop.f32.mrb[0].mxu0
    %609 = vmatprep.mubr.f32.mxu0 0.0
    %610 = vmatmul.mubr.f32.gmra.mrb[0].mxu0 %v457
    %v611 = vpop.f32.mrb[0].mxu0
    %v612 = vadd.f32 0.0, %v611
    %v613 = vpop.f32.mrb[0].mxu0
    %614 = vmatprep.mubr.f32.mxu0 0.0
    %615 = vmatmul.mubr.f32.gmra.mrb[0].mxu0 %v458
    %v616 = vpop.f32.mrb[0].mxu0
    %v617 = vadd.f32 0.0, %v616
    %v618 = vpop.f32.mrb[0].mxu0
    %619 = vdwg.mxu0
    %v620 = vld [vmem:[%s5] sm:$0x1]
    %v622 = vlaneseq
    %v623 = vshrl.u32 %v622, 7
    %v624 = vsub.s32 0, %v623
    %v625 = vrot.slane %v620, %v624
    %627 = vmatprep.subr.mxu0 0.0
    %628 = vmatpush1.msra.mxu0 %v542
    %629 = vmatprep.subr.mxu0 0.0
    %630 = vmatpush1.msra.mxu0 %v547
    %631 = vmatprep.subr.mxu0 0.0
    %632 = vmatpush1.msra.mxu0 %v552
    %633 = vmatprep.subr.mxu0 0.0
    %634 = vmatpush1.msra.mxu0 %v557
    %635 = vmatprep.subr.mxu0 0.0
    %636 = vmatpush1.msra.mxu0 %v562
    %637 = vmatprep.subr.mxu0 0.0
    %638 = vmatpush1.msra.mxu0 %v567
    %639 = vmatprep.subr.mxu0 0.0
    %640 = vmatpush1.msra.mxu0 %v572
    %641 = vmatprep.subr.mxu0 0.0
    %642 = vmatpush1.msra.mxu0 %v577
    %643 = vmatprep.subr.mxu0 0.0
    %644 = vmatpush1.msra.mxu0 %v582
    %645 = vmatprep.subr.mxu0 0.0
    %646 = vmatpush1.msra.mxu0 %v587
    %647 = vmatprep.subr.mxu0 0.0
    %648 = vmatpush1.msra.mxu0 %v592
    %649 = vmatprep.subr.mxu0 0.0
    %650 = vmatpush1.msra.mxu0 %v597
    %651 = vmatprep.subr.mxu0 0.0
    %652 = vmatpush1.msra.mxu0 %v602
    %653 = vmatprep.subr.mxu0 0.0
    %654 = vmatpush1.msra.mxu0 %v607
    %655 = vmatprep.subr.mxu0 0.0
    %656 = vmatpush1.msra.mxu0 %v612
    %657 = vmatprep.subr.mxu0 0.0
    %658 = vmatpush1.msra.mxu0 %v617
    %659 = vmatprep.subr.mxu0 0.0
    %660 = vmatpush1.msra.mxu0 0.0
    %661 = vmatprep.subr.mxu0 0.0
    %662 = vmatpush1.msra.mxu0 0.0
    %663 = vmatprep.subr.mxu0 0.0
    %664 = vmatpush1.msra.mxu0 0.0
    %665 = vmatprep.subr.mxu0 0.0
    %666 = vmatpush1.msra.mxu0 0.0
    %667 = vmatprep.subr.mxu0 0.0
    %668 = vmatpush1.msra.mxu0 0.0
    %669 = vmatprep.subr.mxu0 0.0
    %670 = vmatpush1.msra.mxu0 0.0
    %671 = vmatprep.subr.mxu0 0.0
    %672 = vmatpush1.msra.mxu0 0.0
    %673 = vmatprep.subr.mxu0 0.0
    %674 = vmatpush1.msra.mxu0 0.0
    %675 = vmatprep.subr.mxu0 0.0
    %676 = vmatpush1.msra.mxu0 0.0
    %677 = vmatprep.subr.mxu0 0.0
    %678 = vmatpush1.msra.mxu0 0.0
    %679 = vmatprep.subr.mxu0 0.0
    %680 = vmatpush1.msra.mxu0 0.0
    %681 = vmatprep.subr.mxu0 0.0
    %682 = vmatpush1.msra.mxu0 0.0
    %683 = vmatprep.subr.mxu0 0.0
    %684 = vmatpush1.msra.mxu0 0.0
    %685 = vmatprep.subr.mxu0 0.0
    %686 = vmatpush1.msra.mxu0 0.0
    %687 = vmatprep.subr.mxu0 0.0
    %688 = vmatpush1.msra.mxu0 0.0
    %689 = vmatprep.subr.mxu0 0.0
    %690 = vmatpush1.msra.mxu0 0.0
    %691 = vmatprep.mubr.f32.mxu0 0.0
    %692 = vmatmul.mubr.f32.gmra.mrb[0].mxu0 %v98
    %v693 = vpop.f32.mrb[0].mxu0
    %v694 = vadd.f32 %v625, %v693
    %v695 = vpop.f32.mrb[0].mxu0
    %696 = vmatprep.mubr.f32.mxu0 0.0
    %697 = vmatmul.mubr.f32.gmra.mrb[0].mxu0 %v99
    %v698 = vpop.f32.mrb[0].mxu0
    %v699 = vadd.f32 %v625, %v698
    %v700 = vpop.f32.mrb[0].mxu0
    %701 = vmatprep.mubr.f32.mxu0 0.0
    %702 = vmatmul.mubr.f32.gmra.mrb[0].mxu0 %v100
    %v703 = vpop.f32.mrb[0].mxu0
    %v704 = vadd.f32 %v625, %v703
    %v705 = vpop.f32.mrb[0].mxu0
    %706 = vmatprep.mubr.f32.mxu0 0.0
    %707 = vmatmul.mubr.f32.gmra.mrb[0].mxu0 %v101
    %v708 = vpop.f32.mrb[0].mxu0
    %v709 = vadd.f32 %v625, %v708
    %v710 = vpop.f32.mrb[0].mxu0
    %711 = vmatprep.mubr.f32.mxu0 0.0
    %712 = vmatmul.mubr.f32.gmra.mrb[0].mxu0 %v102
    %v713 = vpop.f32.mrb[0].mxu0
    %v714 = vadd.f32 %v625, %v713
    %v715 = vpop.f32.mrb[0].mxu0
    %716 = vmatprep.mubr.f32.mxu0 0.0
    %717 = vmatmul.mubr.f32.gmra.mrb[0].mxu0 %v103
    %v718 = vpop.f32.mrb[0].mxu0
    %v719 = vadd.f32 %v625, %v718
    %v720 = vpop.f32.mrb[0].mxu0
    %721 = vmatprep.mubr.f32.mxu0 0.0
    %722 = vmatmul.mubr.f32.gmra.mrb[0].mxu0 %v104
    %v723 = vpop.f32.mrb[0].mxu0
    %v724 = vadd.f32 %v625, %v723
    %v725 = vpop.f32.mrb[0].mxu0
    %726 = vmatprep.mubr.f32.mxu0 0.0
    %727 = vmatmul.mubr.f32.gmra.mrb[0].mxu0 %v105
    %v728 = vpop.f32.mrb[0].mxu0
    %v729 = vadd.f32 %v625, %v728
    %v730 = vpop.f32.mrb[0].mxu0
    %731 = vmatprep.mubr.f32.mxu0 0.0
    %732 = vmatmul.mubr.f32.gmra.mrb[0].mxu0 %v106
    %v733 = vpop.f32.mrb[0].mxu0
    %v734 = vadd.f32 %v625, %v733
    %v735 = vpop.f32.mrb[0].mxu0
    %736 = vmatprep.mubr.f32.mxu0 0.0
    %737 = vmatmul.mubr.f32.gmra.mrb[0].mxu0 %v107
    %v738 = vpop.f32.mrb[0].mxu0
    %v739 = vadd.f32 %v625, %v738
    %v740 = vpop.f32.mrb[0].mxu0
    %741 = vmatprep.mubr.f32.mxu0 0.0
    %742 = vmatmul.mubr.f32.gmra.mrb[0].mxu0 %v108
    %v743 = vpop.f32.mrb[0].mxu0
    %v744 = vadd.f32 %v625, %v743
    %v745 = vpop.f32.mrb[0].mxu0
    %746 = vmatprep.mubr.f32.mxu0 0.0
    %747 = vmatmul.mubr.f32.gmra.mrb[0].mxu0 %v109
    %v748 = vpop.f32.mrb[0].mxu0
    %v749 = vadd.f32 %v625, %v748
    %v750 = vpop.f32.mrb[0].mxu0
    %751 = vmatprep.mubr.f32.mxu0 0.0
    %752 = vmatmul.mubr.f32.gmra.mrb[0].mxu0 %v110
    %v753 = vpop.f32.mrb[0].mxu0
    %v754 = vadd.f32 %v625, %v753
    %v755 = vpop.f32.mrb[0].mxu0
    %756 = vmatprep.mubr.f32.mxu0 0.0
    %757 = vmatmul.mubr.f32.gmra.mrb[0].mxu0 %v111
    %v758 = vpop.f32.mrb[0].mxu0
    %v759 = vadd.f32 %v625, %v758
    %v760 = vpop.f32.mrb[0].mxu0
    %761 = vmatprep.mubr.f32.mxu0 0.0
    %762 = vmatmul.mubr.f32.gmra.mrb[0].mxu0 %v112
    %v763 = vpop.f32.mrb[0].mxu0
    %v764 = vadd.f32 %v625, %v763
    %v765 = vpop.f32.mrb[0].mxu0
    %766 = vmatprep.mubr.f32.mxu0 0.0
    %767 = vmatmul.mubr.f32.gmra.mrb[0].mxu0 %v113
    %v768 = vpop.f32.mrb[0].mxu0
    %v769 = vadd.f32 %v625, %v768
    %v770 = vpop.f32.mrb[0].mxu0
    %771 = vdwg.mxu0
    %v772 = vmax.f32 %v694, 0.0
    %v773 = vmax.f32 %v699, 0.0
    %v774 = vmax.f32 %v704, 0.0
    %v775 = vmax.f32 %v709, 0.0
    %v776 = vmax.f32 %v714, 0.0
    %v777 = vmax.f32 %v719, 0.0
    %v778 = vmax.f32 %v724, 0.0
    %v779 = vmax.f32 %v729, 0.0
    %v780 = vmax.f32 %v734, 0.0
    %v781 = vmax.f32 %v739, 0.0
    %v782 = vmax.f32 %v744, 0.0
    %v783 = vmax.f32 %v749, 0.0
    %v784 = vmax.f32 %v754, 0.0
    %v785 = vmax.f32 %v759, 0.0
    %v786 = vmax.f32 %v764, 0.0
    %v787 = vmax.f32 %v769, 0.0
    %v788 = vld [vmem:[#allocation10] sm:$0xff]
    %v789 = vld [vmem:[#allocation10 + $0x8] sm:$0xff]
    %v790 = vld [vmem:[#allocation10 + $0x10] sm:$0xff]
    %v791 = vld [vmem:[#allocation10 + $0x18] sm:$0xff]
    %v792 = vld [vmem:[#allocation10 + $0x20] sm:$0xff]
    %v793 = vld [vmem:[#allocation10 + $0x28] sm:$0xff]
    %v794 = vld [vmem:[#allocation10 + $0x30] sm:$0xff]
    %v795 = vld [vmem:[#allocation10 + $0x38] sm:$0xff]
    %v796 = vld [vmem:[#allocation10 + $0x40] sm:$0xff]
    %v797 = vld [vmem:[#allocation10 + $0x48] sm:$0xff]
    %v798 = vld [vmem:[#allocation10 + $0x50] sm:$0xff]
    %v799 = vld [vmem:[#allocation10 + $0x58] sm:$0xff]
    %v800 = vld [vmem:[#allocation10 + $0x60] sm:$0xff]
    %v801 = vld [vmem:[#allocation10 + $0x68] sm:$0xff]
    %v802 = vld [vmem:[#allocation10 + $0x70] sm:$0xff]
    %v803 = vld [vmem:[#allocation10 + $0x78] sm:$0xff]
    %804 = vmatprep.subr.mxu0 0.0
    %805 = vmatpush1.msra.mxu0 %v788
    %806 = vmatprep.subr.mxu0 0.0
    %807 = vmatpush1.msra.mxu0 %v789
    %808 = vmatprep.subr.mxu0 0.0
    %809 = vmatpush1.msra.mxu0 %v790
    %810 = vmatprep.subr.mxu0 0.0
    %811 = vmatpush1.msra.mxu0 %v791
    %812 = vmatprep.subr.mxu0 0.0
    %813 = vmatpush1.msra.mxu0 %v792
    %814 = vmatprep.subr.mxu0 0.0
    %815 = vmatpush1.msra.mxu0 %v793
    %816 = vmatprep.subr.mxu0 0.0
    %817 = vmatpush1.msra.mxu0 %v794
    %818 = vmatprep.subr.mxu0 0.0
    %819 = vmatpush1.msra.mxu0 %v795
    %820 = vmatprep.subr.mxu0 0.0
    %821 = vmatpush1.msra.mxu0 %v796
    %822 = vmatprep.subr.mxu0 0.0
    %823 = vmatpush1.msra.mxu0 %v797
    %824 = vmatprep.subr.mxu0 0.0
    %825 = vmatpush1.msra.mxu0 %v798
    %826 = vmatprep.subr.mxu0 0.0
    %827 = vmatpush1.msra.mxu0 %v799
    %828 = vmatprep.subr.mxu0 0.0
    %829 = vmatpush1.msra.mxu0 %v800
    %830 = vmatprep.subr.mxu0 0.0
    %831 = vmatpush1.msra.mxu0 %v801
    %832 = vmatprep.subr.mxu0 0.0
    %833 = vmatpush1.msra.mxu0 %v802
    %834 = vmatprep.subr.mxu0 0.0
    %835 = vmatpush1.msra.mxu0 %v803
    %836 = vmatprep.subr.mxu0 0.0
    %837 = vmatpush1.msra.mxu0 0.0
    %838 = vmatprep.subr.mxu0 0.0
    %839 = vmatpush1.msra.mxu0 0.0
    %840 = vmatprep.subr.mxu0 0.0
    %841 = vmatpush1.msra.mxu0 0.0
    %842 = vmatprep.subr.mxu0 0.0
    %843 = vmatpush1.msra.mxu0 0.0
    %844 = vmatprep.subr.mxu0 0.0
    %845 = vmatpush1.msra.mxu0 0.0
    %846 = vmatprep.subr.mxu0 0.0
    %847 = vmatpush1.msra.mxu0 0.0
    %848 = vmatprep.subr.mxu0 0.0
    %849 = vmatpush1.msra.mxu0 0.0
    %850 = vmatprep.subr.mxu0 0.0
    %851 = vmatpush1.msra.mxu0 0.0
    %852 = vmatprep.subr.mxu0 0.0
    %853 = vmatpush1.msra.mxu0 0.0
    %854 = vmatprep.subr.mxu0 0.0
    %855 = vmatpush1.msra.mxu0 0.0
    %856 = vmatprep.subr.mxu0 0.0
    %857 = vmatpush1.msra.mxu0 0.0
    %858 = vmatprep.subr.mxu0 0.0
    %859 = vmatpush1.msra.mxu0 0.0
    %860 = vmatprep.subr.mxu0 0.0
    %861 = vmatpush1.msra.mxu0 0.0
    %862 = vmatprep.subr.mxu0 0.0
    %863 = vmatpush1.msra.mxu0 0.0
    %864 = vmatprep.subr.mxu0 0.0
    %865 = vmatpush1.msra.mxu0 0.0
    %866 = vmatprep.subr.mxu0 0.0
    %867 = vmatpush1.msra.mxu0 0.0
    %868 = vmatprep.mubr.f32.mxu0 0.0
    %869 = vmatmul.mubr.f32.gmra.mrb[0].mxu0 %v772
    %v870 = vpop.f32.mrb[0].mxu0
    %v871 = vadd.f32 0.0, %v870
    %v872 = vpop.f32.mrb[0].mxu0
    %873 = vmatprep.mubr.f32.mxu0 0.0
    %874 = vmatmul.mubr.f32.gmra.mrb[0].mxu0 %v773
    %v875 = vpop.f32.mrb[0].mxu0
    %v876 = vadd.f32 0.0, %v875
    %v877 = vpop.f32.mrb[0].mxu0
    %878 = vmatprep.mubr.f32.mxu0 0.0
    %879 = vmatmul.mubr.f32.gmra.mrb[0].mxu0 %v774
    %v880 = vpop.f32.mrb[0].mxu0
    %v881 = vadd.f32 0.0, %v880
    %v882 = vpop.f32.mrb[0].mxu0
    %883 = vmatprep.mubr.f32.mxu0 0.0
    %884 = vmatmul.mubr.f32.gmra.mrb[0].mxu0 %v775
    %v885 = vpop.f32.mrb[0].mxu0
    %v886 = vadd.f32 0.0, %v885
    %v887 = vpop.f32.mrb[0].mxu0
    %888 = vmatprep.mubr.f32.mxu0 0.0
    %889 = vmatmul.mubr.f32.gmra.mrb[0].mxu0 %v776
    %v890 = vpop.f32.mrb[0].mxu0
    %v891 = vadd.f32 0.0, %v890
    %v892 = vpop.f32.mrb[0].mxu0
    %893 = vmatprep.mubr.f32.mxu0 0.0
    %894 = vmatmul.mubr.f32.gmra.mrb[0].mxu0 %v777
    %v895 = vpop.f32.mrb[0].mxu0
    %v896 = vadd.f32 0.0, %v895
    %v897 = vpop.f32.mrb[0].mxu0
    %898 = vmatprep.mubr.f32.mxu0 0.0
    %899 = vmatmul.mubr.f32.gmra.mrb[0].mxu0 %v778
    %v900 = vpop.f32.mrb[0].mxu0
    %v901 = vadd.f32 0.0, %v900
    %v902 = vpop.f32.mrb[0].mxu0
    %903 = vmatprep.mubr.f32.mxu0 0.0
    %904 = vmatmul.mubr.f32.gmra.mrb[0].mxu0 %v779
    %v905 = vpop.f32.mrb[0].mxu0
    %v906 = vadd.f32 0.0, %v905
    %v907 = vpop.f32.mrb[0].mxu0
    %908 = vmatprep.mubr.f32.mxu0 0.0
    %909 = vmatmul.mubr.f32.gmra.mrb[0].mxu0 %v780
    %v910 = vpop.f32.mrb[0].mxu0
    %v911 = vadd.f32 0.0, %v910
    %v912 = vpop.f32.mrb[0].mxu0
    %913 = vmatprep.mubr.f32.mxu0 0.0
    %914 = vmatmul.mubr.f32.gmra.mrb[0].mxu0 %v781
    %v915 = vpop.f32.mrb[0].mxu0
    %v916 = vadd.f32 0.0, %v915
    %v917 = vpop.f32.mrb[0].mxu0
    %918 = vmatprep.mubr.f32.mxu0 0.0
    %919 = vmatmul.mubr.f32.gmra.mrb[0].mxu0 %v782
    %v920 = vpop.f32.mrb[0].mxu0
    %v921 = vadd.f32 0.0, %v920
    %v922 = vpop.f32.mrb[0].mxu0
    %923 = vmatprep.mubr.f32.mxu0 0.0
    %924 = vmatmul.mubr.f32.gmra.mrb[0].mxu0 %v783
    %v925 = vpop.f32.mrb[0].mxu0
    %v926 = vadd.f32 0.0, %v925
    %v927 = vpop.f32.mrb[0].mxu0
    %928 = vmatprep.mubr.f32.mxu0 0.0
    %929 = vmatmul.mubr.f32.gmra.mrb[0].mxu0 %v784
    %v930 = vpop.f32.mrb[0].mxu0
    %v931 = vadd.f32 0.0, %v930
    %v932 = vpop.f32.mrb[0].mxu0
    %933 = vmatprep.mubr.f32.mxu0 0.0
    %934 = vmatmul.mubr.f32.gmra.mrb[0].mxu0 %v785
    %v935 = vpop.f32.mrb[0].mxu0
    %v936 = vadd.f32 0.0, %v935
    %v937 = vpop.f32.mrb[0].mxu0
    %938 = vmatprep.mubr.f32.mxu0 0.0
    %939 = vmatmul.mubr.f32.gmra.mrb[0].mxu0 %v786
    %v940 = vpop.f32.mrb[0].mxu0
    %v941 = vadd.f32 0.0, %v940
    %v942 = vpop.f32.mrb[0].mxu0
    %943 = vmatprep.mubr.f32.mxu0 0.0
    %944 = vmatmul.mubr.f32.gmra.mrb[0].mxu0 %v787
    %v945 = vpop.f32.mrb[0].mxu0
    %v946 = vadd.f32 0.0, %v945
    %v947 = vpop.f32.mrb[0].mxu0
    %948 = vdwg.mxu0
    %v949 = vld [vmem:[%s7] sm:$0x1]
    %v951 = vlaneseq
    %v952 = vshrl.u32 %v951, 7
    %v953 = vsub.s32 0, %v952
    %v954 = vrot.slane %v949, %v953
    %956 = vmatprep.subr.mxu0 0.0
    %957 = vmatpush1.msra.mxu0 %v871
    %958 = vmatprep.subr.mxu0 0.0
    %959 = vmatpush1.msra.mxu0 %v876
    %960 = vmatprep.subr.mxu0 0.0
    %961 = vmatpush1.msra.mxu0 %v881
    %962 = vmatprep.subr.mxu0 0.0
    %963 = vmatpush1.msra.mxu0 %v886
    %964 = vmatprep.subr.mxu0 0.0
    %965 = vmatpush1.msra.mxu0 %v891
    %966 = vmatprep.subr.mxu0 0.0
    %967 = vmatpush1.msra.mxu0 %v896
    %968 = vmatprep.subr.mxu0 0.0
    %969 = vmatpush1.msra.mxu0 %v901
    %970 = vmatprep.subr.mxu0 0.0
    %971 = vmatpush1.msra.mxu0 %v906
    %972 = vmatprep.subr.mxu0 0.0
    %973 = vmatpush1.msra.mxu0 %v911
    %974 = vmatprep.subr.mxu0 0.0
    %975 = vmatpush1.msra.mxu0 %v916
    %976 = vmatprep.subr.mxu0 0.0
    %977 = vmatpush1.msra.mxu0 %v921
    %978 = vmatprep.subr.mxu0 0.0
    %979 = vmatpush1.msra.mxu0 %v926
    %980 = vmatprep.subr.mxu0 0.0
    %981 = vmatpush1.msra.mxu0 %v931
    %982 = vmatprep.subr.mxu0 0.0
    %983 = vmatpush1.msra.mxu0 %v936
    %984 = vmatprep.subr.mxu0 0.0
    %985 = vmatpush1.msra.mxu0 %v941
    %986 = vmatprep.subr.mxu0 0.0
    %987 = vmatpush1.msra.mxu0 %v946
    %988 = vmatprep.subr.mxu0 0.0
    %989 = vmatpush1.msra.mxu0 0.0
    %990 = vmatprep.subr.mxu0 0.0
    %991 = vmatpush1.msra.mxu0 0.0
    %992 = vmatprep.subr.mxu0 0.0
    %993 = vmatpush1.msra.mxu0 0.0
    %994 = vmatprep.subr.mxu0 0.0
    %995 = vmatpush1.msra.mxu0 0.0
    %996 = vmatprep.subr.mxu0 0.0
    %997 = vmatpush1.msra.mxu0 0.0
    %998 = vmatprep.subr.mxu0 0.0
    %999 = vmatpush1.msra.mxu0 0.0
    %1000 = vmatprep.subr.mxu0 0.0
    %1001 = vmatpush1.msra.mxu0 0.0
    %1002 = vmatprep.subr.mxu0 0.0
    %1003 = vmatpush1.msra.mxu0 0.0
    %1004 = vmatprep.subr.mxu0 0.0
    %1005 = vmatpush1.msra.mxu0 0.0
    %1006 = vmatprep.subr.mxu0 0.0
    %1007 = vmatpush1.msra.mxu0 0.0
    %1008 = vmatprep.subr.mxu0 0.0
    %1009 = vmatpush1.msra.mxu0 0.0
    %1010 = vmatprep.subr.mxu0 0.0
    %1011 = vmatpush1.msra.mxu0 0.0
    %1012 = vmatprep.subr.mxu0 0.0
    %1013 = vmatpush1.msra.mxu0 0.0
    %1014 = vmatprep.subr.mxu0 0.0
    %1015 = vmatpush1.msra.mxu0 0.0
    %1016 = vmatprep.subr.mxu0 0.0
    %1017 = vmatpush1.msra.mxu0 0.0
    %1018 = vmatprep.subr.mxu0 0.0
    %1019 = vmatpush1.msra.mxu0 0.0
    %1020 = vmatprep.mubr.f32.mxu0 0.0
    %1021 = vmatmul.mubr.f32.gmra.mrb[0].mxu0 %v98
    %v1022 = vpop.f32.mrb[0].mxu0
    %v1023 = vadd.f32 %v954, %v1022
    %v1024 = vpop.f32.mrb[0].mxu0
    %1025 = vmatprep.mubr.f32.mxu0 0.0
    %1026 = vmatmul.mubr.f32.gmra.mrb[0].mxu0 %v99
    %v1027 = vpop.f32.mrb[0].mxu0
    %v1028 = vadd.f32 %v954, %v1027
    %v1029 = vpop.f32.mrb[0].mxu0
    %1030 = vmatprep.mubr.f32.mxu0 0.0
    %1031 = vmatmul.mubr.f32.gmra.mrb[0].mxu0 %v100
    %v1032 = vpop.f32.mrb[0].mxu0
    %v1033 = vadd.f32 %v954, %v1032
    %v1034 = vpop.f32.mrb[0].mxu0
    %1035 = vmatprep.mubr.f32.mxu0 0.0
    %1036 = vmatmul.mubr.f32.gmra.mrb[0].mxu0 %v101
    %v1037 = vpop.f32.mrb[0].mxu0
    %v1038 = vadd.f32 %v954, %v1037
    %v1039 = vpop.f32.mrb[0].mxu0
    %1040 = vmatprep.mubr.f32.mxu0 0.0
    %1041 = vmatmul.mubr.f32.gmra.mrb[0].mxu0 %v102
    %v1042 = vpop.f32.mrb[0].mxu0
    %v1043 = vadd.f32 %v954, %v1042
    %v1044 = vpop.f32.mrb[0].mxu0
    %1045 = vmatprep.mubr.f32.mxu0 0.0
    %1046 = vmatmul.mubr.f32.gmra.mrb[0].mxu0 %v103
    %v1047 = vpop.f32.mrb[0].mxu0
    %v1048 = vadd.f32 %v954, %v1047
    %v1049 = vpop.f32.mrb[0].mxu0
    %1050 = vmatprep.mubr.f32.mxu0 0.0
    %1051 = vmatmul.mubr.f32.gmra.mrb[0].mxu0 %v104
    %v1052 = vpop.f32.mrb[0].mxu0
    %v1053 = vadd.f32 %v954, %v1052
    %v1054 = vpop.f32.mrb[0].mxu0
    %1055 = vmatprep.mubr.f32.mxu0 0.0
    %1056 = vmatmul.mubr.f32.gmra.mrb[0].mxu0 %v105
    %v1057 = vpop.f32.mrb[0].mxu0
    %v1058 = vadd.f32 %v954, %v1057
    %v1059 = vpop.f32.mrb[0].mxu0
    %1060 = vmatprep.mubr.f32.mxu0 0.0
    %1061 = vmatmul.mubr.f32.gmra.mrb[0].mxu0 %v106
    %v1062 = vpop.f32.mrb[0].mxu0
    %v1063 = vadd.f32 %v954, %v1062
    %v1064 = vpop.f32.mrb[0].mxu0
    %1065 = vmatprep.mubr.f32.mxu0 0.0
    %1066 = vmatmul.mubr.f32.gmra.mrb[0].mxu0 %v107
    %v1067 = vpop.f32.mrb[0].mxu0
    %v1068 = vadd.f32 %v954, %v1067
    %v1069 = vpop.f32.mrb[0].mxu0
    %1070 = vmatprep.mubr.f32.mxu0 0.0
    %1071 = vmatmul.mubr.f32.gmra.mrb[0].mxu0 %v108
    %v1072 = vpop.f32.mrb[0].mxu0
    %v1073 = vadd.f32 %v954, %v1072
    %v1074 = vpop.f32.mrb[0].mxu0
    %1075 = vmatprep.mubr.f32.mxu0 0.0
    %1076 = vmatmul.mubr.f32.gmra.mrb[0].mxu0 %v109
    %v1077 = vpop.f32.mrb[0].mxu0
    %v1078 = vadd.f32 %v954, %v1077
    %v1079 = vpop.f32.mrb[0].mxu0
    %1080 = vmatprep.mubr.f32.mxu0 0.0
    %1081 = vmatmul.mubr.f32.gmra.mrb[0].mxu0 %v110
    %v1082 = vpop.f32.mrb[0].mxu0
    %v1083 = vadd.f32 %v954, %v1082
    %v1084 = vpop.f32.mrb[0].mxu0
    %1085 = vmatprep.mubr.f32.mxu0 0.0
    %1086 = vmatmul.mubr.f32.gmra.mrb[0].mxu0 %v111
    %v1087 = vpop.f32.mrb[0].mxu0
    %v1088 = vadd.f32 %v954, %v1087
    %v1089 = vpop.f32.mrb[0].mxu0
    %1090 = vmatprep.mubr.f32.mxu0 0.0
    %1091 = vmatmul.mubr.f32.gmra.mrb[0].mxu0 %v112
    %v1092 = vpop.f32.mrb[0].mxu0
    %v1093 = vadd.f32 %v954, %v1092
    %v1094 = vpop.f32.mrb[0].mxu0
    %1095 = vmatprep.mubr.f32.mxu0 0.0
    %1096 = vmatmul.mubr.f32.gmra.mrb[0].mxu0 %v113
    %v1097 = vpop.f32.mrb[0].mxu0
    %v1098 = vadd.f32 %v954, %v1097
    %v1099 = vpop.f32.mrb[0].mxu0
    %1100 = vdwg.mxu0
    %1101 = vst [vmem:[#allocation11] sm:$0xff] %v1023
    %1102 = vst [vmem:[#allocation11 + $0x8] sm:$0xff] %v1028
    %1103 = vst [vmem:[#allocation11 + $0x10] sm:$0xff] %v1033
    %1104 = vst [vmem:[#allocation11 + $0x18] sm:$0xff] %v1038
    %1105 = vst [vmem:[#allocation11 + $0x20] sm:$0xff] %v1043
    %1106 = vst [vmem:[#allocation11 + $0x28] sm:$0xff] %v1048
    %1107 = vst [vmem:[#allocation11 + $0x30] sm:$0xff] %v1053
    %1108 = vst [vmem:[#allocation11 + $0x38] sm:$0xff] %v1058
    %1109 = vst [vmem:[#allocation11 + $0x40] sm:$0xff] %v1063
    %1110 = vst [vmem:[#allocation11 + $0x48] sm:$0xff] %v1068
    %1111 = vst [vmem:[#allocation11 + $0x50] sm:$0xff] %v1073
    %1112 = vst [vmem:[#allocation11 + $0x58] sm:$0xff] %v1078
    %1113 = vst [vmem:[#allocation11 + $0x60] sm:$0xff] %v1083
    %1114 = vst [vmem:[#allocation11 + $0x68] sm:$0xff] %v1088
    %1115 = vst [vmem:[#allocation11 + $0x70] sm:$0xff] %v1093
    %1116 = vst [vmem:[#allocation11 + $0x78] sm:$0xff] %v1098
    // Predicated region
    $region54: #{tpu_custom_call.1} parent=1 // pred_check
      _
    $region55: #{tpu_custom_call.1} parent=1 // pred_check_branch
      %1118 = sbr.rel (0) target = $region57
    $region56: #{tpu_custom_call.1} parent=1 // pred_region
      %s1120 = ssub.s32 2048, 2048
      %1121 = vsyncadd [#allocation4], %s1120
      %s1122 = sshll.u32 [#allocation11], 4
      %s1123 = int_to_ptr.vmem [resolvable:$true] %s1122
      %1128 = dma.vmem_to_hbm [thread:$0]  %s1123, 2048, %s8, [#allocation4], 128, 128, 8
    $region57: #{tpu_custom_call.1} parent=1 // pred_fallthru
      _
    // Predicated region
    $region58: #{tpu_custom_call.1} parent=1 // pred_check
      _
    $region59: #{tpu_custom_call.1} parent=1 // pred_check_branch
      %1130 = sbr.rel (0) target = $region61
    $region60: #{tpu_custom_call.1} parent=1 // pred_region
      %1131 = dma.done [#allocation4], 2048
    $region61: #{tpu_custom_call.1} parent=1 // pred_fallthru
      _
    %1132 = vsyncpa [#allocation3], 1
    %1133 = vsyncpa [#allocation6], 1
    %1134 = vsyncpa [#allocation9], 1
    %1135 = vsyncpa [#allocation4], 1

</llo_original>
